<compile_context>
chip_gen: v5e
topology: v5e:2x2
jax: 0.10.0
libtpu: 0.0.40
codegen_flags: <defaults>
</compile_context>

<pallas_src>
import jax
import jax.numpy as jnp
from jax.experimental import pallas as pl
from jax.experimental.pallas import tpu as pltpu


def _round_up(x, m):
    return ((x + m - 1) // m) * m


def _compl_mul_kernel(x_ref, w_ref, o_ref):
    # x_ref: [2, ck_in, B, Lm]   f32   (0 = real, 1 = imag), modes on lanes
    # w_ref: [2, ck_in, ckp_out, Lm]   (bf16 or f32)
    # o_ref: [2, B, ckp_out, Lm] f32
    ck_in = w_ref.shape[1]
    B = x_ref.shape[2]
    ckp_out = w_ref.shape[2]
    Lm = x_ref.shape[3]

    acc_r = jnp.zeros((B, ckp_out, Lm), jnp.float32)
    acc_i = jnp.zeros((B, ckp_out, Lm), jnp.float32)

    # Static (unrolled) loop over the small contraction axis.  Each weight
    # slab is loaded exactly once and shared by the real and imag updates.
    for i in range(ck_in):
        wr = w_ref[0, i].astype(jnp.float32)        # [ckp_out, Lm]
        wi = w_ref[1, i].astype(jnp.float32)
        xr = x_ref[0, i][:, None, :]                # [B, 1, Lm]
        xi = x_ref[1, i][:, None, :]
        acc_r = acc_r + (xr * wr[None] - xi * wi[None])
        acc_i = acc_i + (xr * wi[None] + xi * wr[None])

    o_ref[0] = acc_r
    o_ref[1] = acc_i


def _choose_lane_tile(Lp0, B, ck, ckp, w_bytes):
    """Pick the mode-tile width (lanes) from VMEM / vreg budgets."""
    LANE = 128
    # Per-lane VMEM bytes: triple-buffered w tile + double-buffered x / out.
    col_bytes = (3 * (2 * ck * ckp * w_bytes)
                 + 2 * (2 * ck * B * 4)
                 + 2 * (2 * B * ckp * 4))
    budget = 24 * 1024 * 1024              # leaves headroom under 32 MiB scoped
    t_vmem = max(LANE, (budget // col_bytes) // LANE * LANE)
    # Accumulators (real+imag) should fit comfortably in the 64-vreg file.
    acc_bytes_per_lane = 2 * B * ckp * 4
    t_vreg = max(LANE, (28 * 4096 // acc_bytes_per_lane) // LANE * LANE)
    t = min(512, t_vmem, t_vreg)
    # Prefer >= 2 grid steps (both v7x TensorCores) when the mode axis allows.
    if Lp0 >= 2 * LANE:
        t = min(t, max(LANE, (Lp0 // 2) // LANE * LANE))
    return min(t, Lp0)


def prepare_weights(weights1, weights2, seq_len, alpha, batch,
                    weight_dtype=jnp.bfloat16):
    """Pack / pad / quantize the weights ONCE, outside the per-call hot path.

    weights1, weights2: [ck, ck, alpha] float32.
    Returns (w_pack, layout) where w_pack: [2, ck, ckp, Lp] weight_dtype.
    """
    ck = weights1.shape[0]
    M = seq_len // 2 + 1
    l = min(alpha, M)
    w_bytes = jnp.dtype(weight_dtype).itemsize
    # Out-channel (sublane) axis padded so stores are sublane-dense
    # (16-multiple for sub-32-bit weight packing, 8 otherwise).
    ckp = _round_up(ck, 16 if w_bytes < 4 else 8)
    Lp0 = _round_up(max(l, 1), 128)
    lane_tile = _choose_lane_tile(Lp0, batch, ck, ckp, w_bytes)
    Lp = _round_up(Lp0, lane_tile)

    w = jnp.stack([weights1[:, :, :l], weights2[:, :, :l]], axis=0)  # [2,ck,ck,l]
    w = jnp.pad(w, ((0, 0), (0, 0), (0, ckp - ck), (0, Lp - l)))
    w_pack = w.astype(weight_dtype)

    layout = dict(seq_len=seq_len, ck=ck, ckp=ckp, l=l, M=M,
                  Lp=Lp, lane_tile=lane_tile)
    return w_pack, layout


def _compl_mul_modes(x_pack, w_pack, lane_tile):
    """x_pack: [2, ck, B, Lp] f32; w_pack: [2, ck, ckp, Lp] -> [2, B, ckp, Lp] f32."""
    _, ck, B, Lp = x_pack.shape
    _, ckw, ckp, Lpw = w_pack.shape
    assert ck == ckw and Lp == Lpw and Lp % lane_tile == 0
    n_steps = Lp // lane_tile

    x_spec = pl.BlockSpec((2, ck, B, lane_tile), lambda m: (0, 0, 0, m))
    o_spec = pl.BlockSpec((2, B, ckp, lane_tile), lambda m: (0, 0, 0, m))

    w_block = (2, ck, ckp, lane_tile)
    w_index = lambda m: (0, 0, 0, m)
    if n_steps > 1:
        # Triple-buffer the (largest) weight DMA so it stays hidden.
        try:
            w_spec = pl.BlockSpec(w_block, w_index, pipeline_mode=pl.Buffered(3))
        except TypeError:
            w_spec = pl.BlockSpec(w_block, w_index)
    else:
        w_spec = pl.BlockSpec(w_block, w_index)

    x_bytes = x_pack.size * 4
    w_bytes = w_pack.size * w_pack.dtype.itemsize
    o_bytes = 2 * B * ckp * Lp * 4
    flops = 8 * B * ck * ckp * Lp            # 4 mul + 4 add per (b, i, o, mode)

    return pl.pallas_call(
        _compl_mul_kernel,
        out_shape=jax.ShapeDtypeStruct((2, B, ckp, Lp), jnp.float32),
        grid=(n_steps,),
        in_specs=[x_spec, w_spec],
        out_specs=o_spec,
        compiler_params=pltpu.CompilerParams(
            dimension_semantics=("parallel",),
            vmem_limit_bytes=32 * 1024 * 1024),
        cost_estimate=pl.CostEstimate(
            flops=flops, transcendentals=0,
            bytes_accessed=x_bytes + w_bytes + o_bytes),
    )(x_pack, w_pack)


def sparse_kernel_ft1d(x, w_pack, layout):
    """x: [B, N, c, k] float32; w_pack/layout from prepare_weights."""
    B, N, c, k = x.shape
    ck = layout["ck"]
    ckp = layout["ckp"]
    l = layout["l"]
    M = layout["M"]
    Lp = layout["Lp"]
    lane_tile = layout["lane_tile"]
    assert N == layout["seq_len"] and c * k == ck

    xv = x.reshape(B, N, ck).transpose(0, 2, 1)              # [B, ck, N]
    x_fft = jnp.fft.rfft(xv.astype(jnp.float32), axis=-1)    # [B, ck, M] complex64

    xr = jnp.real(x_fft[:, :, :l])                           # [B, ck, l]
    xi = jnp.imag(x_fft[:, :, :l])
    x_pack = jnp.stack([xr, xi], axis=0)                     # [2, B, ck, l]
    x_pack = jnp.transpose(x_pack, (0, 2, 1, 3))             # [2, ck, B, l]
    x_pack = jnp.pad(x_pack, ((0, 0), (0, 0), (0, 0), (0, Lp - l)))
    x_pack = x_pack.astype(jnp.float32)

    out_pack = _compl_mul_modes(x_pack, w_pack, lane_tile)   # [2, B, ckp, Lp]
    out_r = out_pack[0, :, :ck, :]                           # [B, ck, Lp]
    out_i = out_pack[1, :, :ck, :]

    # Padded mode tail is already zero (x and w zero-padded) -> no zeros+scatter.
    if Lp >= M:
        out_ft = (out_r[:, :, :M] + 1j * out_i[:, :, :M]).astype(jnp.complex64)
    else:
        out_ft = (out_r[:, :, :l] + 1j * out_i[:, :, :l]).astype(jnp.complex64)
        out_ft = jnp.pad(out_ft, ((0, 0), (0, 0), (0, M - l)))

    y = jnp.fft.irfft(out_ft, n=N, axis=-1)                  # [B, ck, N]
    y = y.transpose(0, 2, 1).reshape(B, N, c, k).astype(jnp.float32)
    return y


def _reference(x, weights1, weights2, alpha):
    # Pure-JAX reference mirroring the PyTorch forward.
    B, N, c, k = x.shape
    ck = c * k
    xv = x.reshape(B, N, ck).transpose(0, 2, 1)
    x_fft = jnp.fft.rfft(xv, axis=-1)
    M = x_fft.shape[-1]
    l = min(alpha, M)
    W = (weights1[:, :, :l] + 1j * weights2[:, :, :l]).astype(jnp.complex64)
    out = jnp.einsum('bix,iox->box', x_fft[:, :, :l], W)
    out_ft = jnp.zeros((B, ck, M), dtype=jnp.complex64).at[:, :, :l].set(out)
    y = jnp.fft.irfft(out_ft, n=N, axis=-1)
    return y.transpose(0, 2, 1).reshape(B, N, c, k).astype(jnp.float32)


if __name__ == "__main__":
    # Module hyperparameters (small, consistent with the forward).
    k = 4
    c = 4
    alpha = 16
    B, N = 2, 16
    ck = c * k
    scale = 1.0 / (c * k * c * k)

    key = jax.random.PRNGKey(0)
    kx, kw1, kw2 = jax.random.split(key, 3)
    x = jax.random.normal(kx, (B, N, c, k), dtype=jnp.float32)
    weights1 = scale * jax.random.normal(kw1, (ck, ck, alpha), dtype=jnp.float32)
    weights2 = scale * jax.random.normal(kw2, (ck, ck, alpha), dtype=jnp.float32)

    # Weights are packed / padded / bf16-quantized once, outside the hot path.
    w_pack, layout = prepare_weights(weights1, weights2, seq_len=N, alpha=alpha,
                                     batch=B, weight_dtype=jnp.bfloat16)

    fwd = jax.jit(lambda xx: sparse_kernel_ft1d(xx, w_pack, layout))
    y = jax.block_until_ready(fwd(x))

    # Reference uses the same bf16-rounded weights so the check isolates the
    # kernel arithmetic (f32 accumulation) from the weight-quantization choice.
    w1_q = weights1.astype(jnp.bfloat16).astype(jnp.float32)
    w2_q = weights2.astype(jnp.bfloat16).astype(jnp.float32)
    y_ref = jax.block_until_ready(_reference(x, w1_q, w2_q, alpha))

    assert y.shape == (B, N, c, k)
    assert jnp.allclose(y, y_ref, rtol=1e-4, atol=1e-5)

    print("KERNEL_OK")
</pallas_src>

<mosaic_0001>
module attributes {stable_mosaic.version = 11 : i64} {
  func.func @_compl_mul_kernel(%arg0: i32, %arg1: memref<2x16x2x128xf32, #tpu.memory_space<vmem>>, %arg2: memref<2x16x16x128xbf16, #tpu.memory_space<vmem>>, %arg3: memref<2x2x16x128xf32, #tpu.memory_space<vmem>>) attributes {dimension_semantics = [#tpu.dimension_semantics<parallel>], iteration_bounds = array<i64: 1>, scalar_prefetch = 0 : i64, scratch_operands = 0 : i64, tpu.core_type = #tpu.core_type<tc>, window_params = [{transform_indices = @transform_0, window_bounds = array<i64: 2, 16, 2, 128>}, {transform_indices = @transform_1, window_bounds = array<i64: 2, 16, 16, 128>}, {transform_indices = @transform_2, window_bounds = array<i64: 2, 2, 16, 128>}]} {
    %cst = arith.constant 0.000000e+00 : f32
    %0 = vector.broadcast %cst : f32 to vector<2x16x128xf32>
    %cst_0 = arith.constant 0.000000e+00 : f32
    %1 = vector.broadcast %cst_0 : f32 to vector<2x16x128xf32>
    %c0 = arith.constant 0 : index
    %c0_1 = arith.constant 0 : index
    %c0_2 = arith.constant 0 : index
    %c0_3 = arith.constant 0 : index
    %2 = vector.load %arg2[%c0, %c0_1, %c0_2, %c0_3] : memref<2x16x16x128xbf16, #tpu.memory_space<vmem>>, vector<1x1x16x128xbf16>
    %3 = vector.shape_cast %2 : vector<1x1x16x128xbf16> to vector<16x128xbf16>
    %4 = arith.extf %3 : vector<16x128xbf16> to vector<16x128xf32>
    %c1 = arith.constant 1 : index
    %c0_4 = arith.constant 0 : index
    %c0_5 = arith.constant 0 : index
    %c0_6 = arith.constant 0 : index
    %5 = vector.load %arg2[%c1, %c0_4, %c0_5, %c0_6] : memref<2x16x16x128xbf16, #tpu.memory_space<vmem>>, vector<1x1x16x128xbf16>
    %6 = vector.shape_cast %5 : vector<1x1x16x128xbf16> to vector<16x128xbf16>
    %7 = arith.extf %6 : vector<16x128xbf16> to vector<16x128xf32>
    %c0_7 = arith.constant 0 : index
    %c0_8 = arith.constant 0 : index
    %c0_9 = arith.constant 0 : index
    %c0_10 = arith.constant 0 : index
    %8 = vector.load %arg1[%c0_7, %c0_8, %c0_9, %c0_10] : memref<2x16x2x128xf32, #tpu.memory_space<vmem>>, vector<1x1x2x128xf32>
    %9 = vector.shape_cast %8 : vector<1x1x2x128xf32> to vector<2x128xf32>
    %10 = vector.shape_cast %9 : vector<2x128xf32> to vector<2x1x128xf32>
    %c1_11 = arith.constant 1 : index
    %c0_12 = arith.constant 0 : index
    %c0_13 = arith.constant 0 : index
    %c0_14 = arith.constant 0 : index
    %11 = vector.load %arg1[%c1_11, %c0_12, %c0_13, %c0_14] : memref<2x16x2x128xf32, #tpu.memory_space<vmem>>, vector<1x1x2x128xf32>
    %12 = vector.shape_cast %11 : vector<1x1x2x128xf32> to vector<2x128xf32>
    %13 = vector.shape_cast %12 : vector<2x128xf32> to vector<2x1x128xf32>
    %14 = vector.shape_cast %4 : vector<16x128xf32> to vector<1x16x128xf32>
    %15 = vector.broadcast %10 : vector<2x1x128xf32> to vector<2x16x128xf32>
    %16 = vector.broadcast %14 : vector<1x16x128xf32> to vector<2x16x128xf32>
    %17 = arith.mulf %15, %16 : vector<2x16x128xf32>
    %18 = vector.shape_cast %7 : vector<16x128xf32> to vector<1x16x128xf32>
    %19 = vector.broadcast %13 : vector<2x1x128xf32> to vector<2x16x128xf32>
    %20 = vector.broadcast %18 : vector<1x16x128xf32> to vector<2x16x128xf32>
    %21 = arith.mulf %19, %20 : vector<2x16x128xf32>
    %22 = arith.subf %17, %21 : vector<2x16x128xf32>
    %23 = arith.addf %0, %22 : vector<2x16x128xf32>
    %24 = vector.shape_cast %7 : vector<16x128xf32> to vector<1x16x128xf32>
    %25 = vector.broadcast %10 : vector<2x1x128xf32> to vector<2x16x128xf32>
    %26 = vector.broadcast %24 : vector<1x16x128xf32> to vector<2x16x128xf32>
    %27 = arith.mulf %25, %26 : vector<2x16x128xf32>
    %28 = vector.shape_cast %4 : vector<16x128xf32> to vector<1x16x128xf32>
    %29 = vector.broadcast %13 : vector<2x1x128xf32> to vector<2x16x128xf32>
    %30 = vector.broadcast %28 : vector<1x16x128xf32> to vector<2x16x128xf32>
    %31 = arith.mulf %29, %30 : vector<2x16x128xf32>
    %32 = arith.addf %27, %31 : vector<2x16x128xf32>
    %33 = arith.addf %1, %32 : vector<2x16x128xf32>
    %c0_15 = arith.constant 0 : index
    %c1_16 = arith.constant 1 : index
    %c0_17 = arith.constant 0 : index
    %c0_18 = arith.constant 0 : index
    %34 = vector.load %arg2[%c0_15, %c1_16, %c0_17, %c0_18] : memref<2x16x16x128xbf16, #tpu.memory_space<vmem>>, vector<1x1x16x128xbf16>
    %35 = vector.shape_cast %34 : vector<1x1x16x128xbf16> to vector<16x128xbf16>
    %36 = arith.extf %35 : vector<16x128xbf16> to vector<16x128xf32>
    %c1_19 = arith.constant 1 : index
    %c1_20 = arith.constant 1 : index
    %c0_21 = arith.constant 0 : index
    %c0_22 = arith.constant 0 : index
    %37 = vector.load %arg2[%c1_19, %c1_20, %c0_21, %c0_22] : memref<2x16x16x128xbf16, #tpu.memory_space<vmem>>, vector<1x1x16x128xbf16>
    %38 = vector.shape_cast %37 : vector<1x1x16x128xbf16> to vector<16x128xbf16>
    %39 = arith.extf %38 : vector<16x128xbf16> to vector<16x128xf32>
    %c0_23 = arith.constant 0 : index
    %c1_24 = arith.constant 1 : index
    %c0_25 = arith.constant 0 : index
    %c0_26 = arith.constant 0 : index
    %40 = vector.load %arg1[%c0_23, %c1_24, %c0_25, %c0_26] : memref<2x16x2x128xf32, #tpu.memory_space<vmem>>, vector<1x1x2x128xf32>
    %41 = vector.shape_cast %40 : vector<1x1x2x128xf32> to vector<2x128xf32>
    %42 = vector.shape_cast %41 : vector<2x128xf32> to vector<2x1x128xf32>
    %c1_27 = arith.constant 1 : index
    %c1_28 = arith.constant 1 : index
    %c0_29 = arith.constant 0 : index
    %c0_30 = arith.constant 0 : index
    %43 = vector.load %arg1[%c1_27, %c1_28, %c0_29, %c0_30] : memref<2x16x2x128xf32, #tpu.memory_space<vmem>>, vector<1x1x2x128xf32>
    %44 = vector.shape_cast %43 : vector<1x1x2x128xf32> to vector<2x128xf32>
    %45 = vector.shape_cast %44 : vector<2x128xf32> to vector<2x1x128xf32>
    %46 = vector.shape_cast %36 : vector<16x128xf32> to vector<1x16x128xf32>
    %47 = vector.broadcast %42 : vector<2x1x128xf32> to vector<2x16x128xf32>
    %48 = vector.broadcast %46 : vector<1x16x128xf32> to vector<2x16x128xf32>
    %49 = arith.mulf %47, %48 : vector<2x16x128xf32>
    %50 = vector.shape_cast %39 : vector<16x128xf32> to vector<1x16x128xf32>
    %51 = vector.broadcast %45 : vector<2x1x128xf32> to vector<2x16x128xf32>
    %52 = vector.broadcast %50 : vector<1x16x128xf32> to vector<2x16x128xf32>
    %53 = arith.mulf %51, %52 : vector<2x16x128xf32>
    %54 = arith.subf %49, %53 : vector<2x16x128xf32>
    %55 = arith.addf %23, %54 : vector<2x16x128xf32>
    %56 = vector.shape_cast %39 : vector<16x128xf32> to vector<1x16x128xf32>
    %57 = vector.broadcast %42 : vector<2x1x128xf32> to vector<2x16x128xf32>
    %58 = vector.broadcast %56 : vector<1x16x128xf32> to vector<2x16x128xf32>
    %59 = arith.mulf %57, %58 : vector<2x16x128xf32>
    %60 = vector.shape_cast %36 : vector<16x128xf32> to vector<1x16x128xf32>
    %61 = vector.broadcast %45 : vector<2x1x128xf32> to vector<2x16x128xf32>
    %62 = vector.broadcast %60 : vector<1x16x128xf32> to vector<2x16x128xf32>
    %63 = arith.mulf %61, %62 : vector<2x16x128xf32>
    %64 = arith.addf %59, %63 : vector<2x16x128xf32>
    %65 = arith.addf %33, %64 : vector<2x16x128xf32>
    %c0_31 = arith.constant 0 : index
    %c2 = arith.constant 2 : index
    %c0_32 = arith.constant 0 : index
    %c0_33 = arith.constant 0 : index
    %66 = vector.load %arg2[%c0_31, %c2, %c0_32, %c0_33] : memref<2x16x16x128xbf16, #tpu.memory_space<vmem>>, vector<1x1x16x128xbf16>
    %67 = vector.shape_cast %66 : vector<1x1x16x128xbf16> to vector<16x128xbf16>
    %68 = arith.extf %67 : vector<16x128xbf16> to vector<16x128xf32>
    %c1_34 = arith.constant 1 : index
    %c2_35 = arith.constant 2 : index
    %c0_36 = arith.constant 0 : index
    %c0_37 = arith.constant 0 : index
    %69 = vector.load %arg2[%c1_34, %c2_35, %c0_36, %c0_37] : memref<2x16x16x128xbf16, #tpu.memory_space<vmem>>, vector<1x1x16x128xbf16>
    %70 = vector.shape_cast %69 : vector<1x1x16x128xbf16> to vector<16x128xbf16>
    %71 = arith.extf %70 : vector<16x128xbf16> to vector<16x128xf32>
    %c0_38 = arith.constant 0 : index
    %c2_39 = arith.constant 2 : index
    %c0_40 = arith.constant 0 : index
    %c0_41 = arith.constant 0 : index
    %72 = vector.load %arg1[%c0_38, %c2_39, %c0_40, %c0_41] : memref<2x16x2x128xf32, #tpu.memory_space<vmem>>, vector<1x1x2x128xf32>
    %73 = vector.shape_cast %72 : vector<1x1x2x128xf32> to vector<2x128xf32>
    %74 = vector.shape_cast %73 : vector<2x128xf32> to vector<2x1x128xf32>
    %c1_42 = arith.constant 1 : index
    %c2_43 = arith.constant 2 : index
    %c0_44 = arith.constant 0 : index
    %c0_45 = arith.constant 0 : index
    %75 = vector.load %arg1[%c1_42, %c2_43, %c0_44, %c0_45] : memref<2x16x2x128xf32, #tpu.memory_space<vmem>>, vector<1x1x2x128xf32>
    %76 = vector.shape_cast %75 : vector<1x1x2x128xf32> to vector<2x128xf32>
    %77 = vector.shape_cast %76 : vector<2x128xf32> to vector<2x1x128xf32>
    %78 = vector.shape_cast %68 : vector<16x128xf32> to vector<1x16x128xf32>
    %79 = vector.broadcast %74 : vector<2x1x128xf32> to vector<2x16x128xf32>
    %80 = vector.broadcast %78 : vector<1x16x128xf32> to vector<2x16x128xf32>
    %81 = arith.mulf %79, %80 : vector<2x16x128xf32>
    %82 = vector.shape_cast %71 : vector<16x128xf32> to vector<1x16x128xf32>
    %83 = vector.broadcast %77 : vector<2x1x128xf32> to vector<2x16x128xf32>
    %84 = vector.broadcast %82 : vector<1x16x128xf32> to vector<2x16x128xf32>
    %85 = arith.mulf %83, %84 : vector<2x16x128xf32>
    %86 = arith.subf %81, %85 : vector<2x16x128xf32>
    %87 = arith.addf %55, %86 : vector<2x16x128xf32>
    %88 = vector.shape_cast %71 : vector<16x128xf32> to vector<1x16x128xf32>
    %89 = vector.broadcast %74 : vector<2x1x128xf32> to vector<2x16x128xf32>
    %90 = vector.broadcast %88 : vector<1x16x128xf32> to vector<2x16x128xf32>
    %91 = arith.mulf %89, %90 : vector<2x16x128xf32>
    %92 = vector.shape_cast %68 : vector<16x128xf32> to vector<1x16x128xf32>
    %93 = vector.broadcast %77 : vector<2x1x128xf32> to vector<2x16x128xf32>
    %94 = vector.broadcast %92 : vector<1x16x128xf32> to vector<2x16x128xf32>
    %95 = arith.mulf %93, %94 : vector<2x16x128xf32>
    %96 = arith.addf %91, %95 : vector<2x16x128xf32>
    %97 = arith.addf %65, %96 : vector<2x16x128xf32>
    %c0_46 = arith.constant 0 : index
    %c3 = arith.constant 3 : index
    %c0_47 = arith.constant 0 : index
    %c0_48 = arith.constant 0 : index
    %98 = vector.load %arg2[%c0_46, %c3, %c0_47, %c0_48] : memref<2x16x16x128xbf16, #tpu.memory_space<vmem>>, vector<1x1x16x128xbf16>
    %99 = vector.shape_cast %98 : vector<1x1x16x128xbf16> to vector<16x128xbf16>
    %100 = arith.extf %99 : vector<16x128xbf16> to vector<16x128xf32>
    %c1_49 = arith.constant 1 : index
    %c3_50 = arith.constant 3 : index
    %c0_51 = arith.constant 0 : index
    %c0_52 = arith.constant 0 : index
    %101 = vector.load %arg2[%c1_49, %c3_50, %c0_51, %c0_52] : memref<2x16x16x128xbf16, #tpu.memory_space<vmem>>, vector<1x1x16x128xbf16>
    %102 = vector.shape_cast %101 : vector<1x1x16x128xbf16> to vector<16x128xbf16>
    %103 = arith.extf %102 : vector<16x128xbf16> to vector<16x128xf32>
    %c0_53 = arith.constant 0 : index
    %c3_54 = arith.constant 3 : index
    %c0_55 = arith.constant 0 : index
    %c0_56 = arith.constant 0 : index
    %104 = vector.load %arg1[%c0_53, %c3_54, %c0_55, %c0_56] : memref<2x16x2x128xf32, #tpu.memory_space<vmem>>, vector<1x1x2x128xf32>
    %105 = vector.shape_cast %104 : vector<1x1x2x128xf32> to vector<2x128xf32>
    %106 = vector.shape_cast %105 : vector<2x128xf32> to vector<2x1x128xf32>
    %c1_57 = arith.constant 1 : index
    %c3_58 = arith.constant 3 : index
    %c0_59 = arith.constant 0 : index
    %c0_60 = arith.constant 0 : index
    %107 = vector.load %arg1[%c1_57, %c3_58, %c0_59, %c0_60] : memref<2x16x2x128xf32, #tpu.memory_space<vmem>>, vector<1x1x2x128xf32>
    %108 = vector.shape_cast %107 : vector<1x1x2x128xf32> to vector<2x128xf32>
    %109 = vector.shape_cast %108 : vector<2x128xf32> to vector<2x1x128xf32>
    %110 = vector.shape_cast %100 : vector<16x128xf32> to vector<1x16x128xf32>
    %111 = vector.broadcast %106 : vector<2x1x128xf32> to vector<2x16x128xf32>
    %112 = vector.broadcast %110 : vector<1x16x128xf32> to vector<2x16x128xf32>
    %113 = arith.mulf %111, %112 : vector<2x16x128xf32>
    %114 = vector.shape_cast %103 : vector<16x128xf32> to vector<1x16x128xf32>
    %115 = vector.broadcast %109 : vector<2x1x128xf32> to vector<2x16x128xf32>
    %116 = vector.broadcast %114 : vector<1x16x128xf32> to vector<2x16x128xf32>
    %117 = arith.mulf %115, %116 : vector<2x16x128xf32>
    %118 = arith.subf %113, %117 : vector<2x16x128xf32>
    %119 = arith.addf %87, %118 : vector<2x16x128xf32>
    %120 = vector.shape_cast %103 : vector<16x128xf32> to vector<1x16x128xf32>
    %121 = vector.broadcast %106 : vector<2x1x128xf32> to vector<2x16x128xf32>
    %122 = vector.broadcast %120 : vector<1x16x128xf32> to vector<2x16x128xf32>
    %123 = arith.mulf %121, %122 : vector<2x16x128xf32>
    %124 = vector.shape_cast %100 : vector<16x128xf32> to vector<1x16x128xf32>
    %125 = vector.broadcast %109 : vector<2x1x128xf32> to vector<2x16x128xf32>
    %126 = vector.broadcast %124 : vector<1x16x128xf32> to vector<2x16x128xf32>
    %127 = arith.mulf %125, %126 : vector<2x16x128xf32>
    %128 = arith.addf %123, %127 : vector<2x16x128xf32>
    %129 = arith.addf %97, %128 : vector<2x16x128xf32>
    %c0_61 = arith.constant 0 : index
    %c4 = arith.constant 4 : index
    %c0_62 = arith.constant 0 : index
    %c0_63 = arith.constant 0 : index
    %130 = vector.load %arg2[%c0_61, %c4, %c0_62, %c0_63] : memref<2x16x16x128xbf16, #tpu.memory_space<vmem>>, vector<1x1x16x128xbf16>
    %131 = vector.shape_cast %130 : vector<1x1x16x128xbf16> to vector<16x128xbf16>
    %132 = arith.extf %131 : vector<16x128xbf16> to vector<16x128xf32>
    %c1_64 = arith.constant 1 : index
    %c4_65 = arith.constant 4 : index
    %c0_66 = arith.constant 0 : index
    %c0_67 = arith.constant 0 : index
    %133 = vector.load %arg2[%c1_64, %c4_65, %c0_66, %c0_67] : memref<2x16x16x128xbf16, #tpu.memory_space<vmem>>, vector<1x1x16x128xbf16>
    %134 = vector.shape_cast %133 : vector<1x1x16x128xbf16> to vector<16x128xbf16>
    %135 = arith.extf %134 : vector<16x128xbf16> to vector<16x128xf32>
    %c0_68 = arith.constant 0 : index
    %c4_69 = arith.constant 4 : index
    %c0_70 = arith.constant 0 : index
    %c0_71 = arith.constant 0 : index
    %136 = vector.load %arg1[%c0_68, %c4_69, %c0_70, %c0_71] : memref<2x16x2x128xf32, #tpu.memory_space<vmem>>, vector<1x1x2x128xf32>
    %137 = vector.shape_cast %136 : vector<1x1x2x128xf32> to vector<2x128xf32>
    %138 = vector.shape_cast %137 : vector<2x128xf32> to vector<2x1x128xf32>
    %c1_72 = arith.constant 1 : index
    %c4_73 = arith.constant 4 : index
    %c0_74 = arith.constant 0 : index
    %c0_75 = arith.constant 0 : index
    %139 = vector.load %arg1[%c1_72, %c4_73, %c0_74, %c0_75] : memref<2x16x2x128xf32, #tpu.memory_space<vmem>>, vector<1x1x2x128xf32>
    %140 = vector.shape_cast %139 : vector<1x1x2x128xf32> to vector<2x128xf32>
    %141 = vector.shape_cast %140 : vector<2x128xf32> to vector<2x1x128xf32>
    %142 = vector.shape_cast %132 : vector<16x128xf32> to vector<1x16x128xf32>
    %143 = vector.broadcast %138 : vector<2x1x128xf32> to vector<2x16x128xf32>
    %144 = vector.broadcast %142 : vector<1x16x128xf32> to vector<2x16x128xf32>
    %145 = arith.mulf %143, %144 : vector<2x16x128xf32>
    %146 = vector.shape_cast %135 : vector<16x128xf32> to vector<1x16x128xf32>
    %147 = vector.broadcast %141 : vector<2x1x128xf32> to vector<2x16x128xf32>
    %148 = vector.broadcast %146 : vector<1x16x128xf32> to vector<2x16x128xf32>
    %149 = arith.mulf %147, %148 : vector<2x16x128xf32>
    %150 = arith.subf %145, %149 : vector<2x16x128xf32>
    %151 = arith.addf %119, %150 : vector<2x16x128xf32>
    %152 = vector.shape_cast %135 : vector<16x128xf32> to vector<1x16x128xf32>
    %153 = vector.broadcast %138 : vector<2x1x128xf32> to vector<2x16x128xf32>
    %154 = vector.broadcast %152 : vector<1x16x128xf32> to vector<2x16x128xf32>
    %155 = arith.mulf %153, %154 : vector<2x16x128xf32>
    %156 = vector.shape_cast %132 : vector<16x128xf32> to vector<1x16x128xf32>
    %157 = vector.broadcast %141 : vector<2x1x128xf32> to vector<2x16x128xf32>
    %158 = vector.broadcast %156 : vector<1x16x128xf32> to vector<2x16x128xf32>
    %159 = arith.mulf %157, %158 : vector<2x16x128xf32>
    %160 = arith.addf %155, %159 : vector<2x16x128xf32>
    %161 = arith.addf %129, %160 : vector<2x16x128xf32>
    %c0_76 = arith.constant 0 : index
    %c5 = arith.constant 5 : index
    %c0_77 = arith.constant 0 : index
    %c0_78 = arith.constant 0 : index
    %162 = vector.load %arg2[%c0_76, %c5, %c0_77, %c0_78] : memref<2x16x16x128xbf16, #tpu.memory_space<vmem>>, vector<1x1x16x128xbf16>
    %163 = vector.shape_cast %162 : vector<1x1x16x128xbf16> to vector<16x128xbf16>
    %164 = arith.extf %163 : vector<16x128xbf16> to vector<16x128xf32>
    %c1_79 = arith.constant 1 : index
    %c5_80 = arith.constant 5 : index
    %c0_81 = arith.constant 0 : index
    %c0_82 = arith.constant 0 : index
    %165 = vector.load %arg2[%c1_79, %c5_80, %c0_81, %c0_82] : memref<2x16x16x128xbf16, #tpu.memory_space<vmem>>, vector<1x1x16x128xbf16>
    %166 = vector.shape_cast %165 : vector<1x1x16x128xbf16> to vector<16x128xbf16>
    %167 = arith.extf %166 : vector<16x128xbf16> to vector<16x128xf32>
    %c0_83 = arith.constant 0 : index
    %c5_84 = arith.constant 5 : index
    %c0_85 = arith.constant 0 : index
    %c0_86 = arith.constant 0 : index
    %168 = vector.load %arg1[%c0_83, %c5_84, %c0_85, %c0_86] : memref<2x16x2x128xf32, #tpu.memory_space<vmem>>, vector<1x1x2x128xf32>
    %169 = vector.shape_cast %168 : vector<1x1x2x128xf32> to vector<2x128xf32>
    %170 = vector.shape_cast %169 : vector<2x128xf32> to vector<2x1x128xf32>
    %c1_87 = arith.constant 1 : index
    %c5_88 = arith.constant 5 : index
    %c0_89 = arith.constant 0 : index
    %c0_90 = arith.constant 0 : index
    %171 = vector.load %arg1[%c1_87, %c5_88, %c0_89, %c0_90] : memref<2x16x2x128xf32, #tpu.memory_space<vmem>>, vector<1x1x2x128xf32>
    %172 = vector.shape_cast %171 : vector<1x1x2x128xf32> to vector<2x128xf32>
    %173 = vector.shape_cast %172 : vector<2x128xf32> to vector<2x1x128xf32>
    %174 = vector.shape_cast %164 : vector<16x128xf32> to vector<1x16x128xf32>
    %175 = vector.broadcast %170 : vector<2x1x128xf32> to vector<2x16x128xf32>
    %176 = vector.broadcast %174 : vector<1x16x128xf32> to vector<2x16x128xf32>
    %177 = arith.mulf %175, %176 : vector<2x16x128xf32>
    %178 = vector.shape_cast %167 : vector<16x128xf32> to vector<1x16x128xf32>
    %179 = vector.broadcast %173 : vector<2x1x128xf32> to vector<2x16x128xf32>
    %180 = vector.broadcast %178 : vector<1x16x128xf32> to vector<2x16x128xf32>
    %181 = arith.mulf %179, %180 : vector<2x16x128xf32>
    %182 = arith.subf %177, %181 : vector<2x16x128xf32>
    %183 = arith.addf %151, %182 : vector<2x16x128xf32>
    %184 = vector.shape_cast %167 : vector<16x128xf32> to vector<1x16x128xf32>
    %185 = vector.broadcast %170 : vector<2x1x128xf32> to vector<2x16x128xf32>
    %186 = vector.broadcast %184 : vector<1x16x128xf32> to vector<2x16x128xf32>
    %187 = arith.mulf %185, %186 : vector<2x16x128xf32>
    %188 = vector.shape_cast %164 : vector<16x128xf32> to vector<1x16x128xf32>
    %189 = vector.broadcast %173 : vector<2x1x128xf32> to vector<2x16x128xf32>
    %190 = vector.broadcast %188 : vector<1x16x128xf32> to vector<2x16x128xf32>
    %191 = arith.mulf %189, %190 : vector<2x16x128xf32>
    %192 = arith.addf %187, %191 : vector<2x16x128xf32>
    %193 = arith.addf %161, %192 : vector<2x16x128xf32>
    %c0_91 = arith.constant 0 : index
    %c6 = arith.constant 6 : index
    %c0_92 = arith.constant 0 : index
    %c0_93 = arith.constant 0 : index
    %194 = vector.load %arg2[%c0_91, %c6, %c0_92, %c0_93] : memref<2x16x16x128xbf16, #tpu.memory_space<vmem>>, vector<1x1x16x128xbf16>
    %195 = vector.shape_cast %194 : vector<1x1x16x128xbf16> to vector<16x128xbf16>
    %196 = arith.extf %195 : vector<16x128xbf16> to vector<16x128xf32>
    %c1_94 = arith.constant 1 : index
    %c6_95 = arith.constant 6 : index
    %c0_96 = arith.constant 0 : index
    %c0_97 = arith.constant 0 : index
    %197 = vector.load %arg2[%c1_94, %c6_95, %c0_96, %c0_97] : memref<2x16x16x128xbf16, #tpu.memory_space<vmem>>, vector<1x1x16x128xbf16>
    %198 = vector.shape_cast %197 : vector<1x1x16x128xbf16> to vector<16x128xbf16>
    %199 = arith.extf %198 : vector<16x128xbf16> to vector<16x128xf32>
    %c0_98 = arith.constant 0 : index
    %c6_99 = arith.constant 6 : index
    %c0_100 = arith.constant 0 : index
    %c0_101 = arith.constant 0 : index
    %200 = vector.load %arg1[%c0_98, %c6_99, %c0_100, %c0_101] : memref<2x16x2x128xf32, #tpu.memory_space<vmem>>, vector<1x1x2x128xf32>
    %201 = vector.shape_cast %200 : vector<1x1x2x128xf32> to vector<2x128xf32>
    %202 = vector.shape_cast %201 : vector<2x128xf32> to vector<2x1x128xf32>
    %c1_102 = arith.constant 1 : index
    %c6_103 = arith.constant 6 : index
    %c0_104 = arith.constant 0 : index
    %c0_105 = arith.constant 0 : index
    %203 = vector.load %arg1[%c1_102, %c6_103, %c0_104, %c0_105] : memref<2x16x2x128xf32, #tpu.memory_space<vmem>>, vector<1x1x2x128xf32>
    %204 = vector.shape_cast %203 : vector<1x1x2x128xf32> to vector<2x128xf32>
    %205 = vector.shape_cast %204 : vector<2x128xf32> to vector<2x1x128xf32>
    %206 = vector.shape_cast %196 : vector<16x128xf32> to vector<1x16x128xf32>
    %207 = vector.broadcast %202 : vector<2x1x128xf32> to vector<2x16x128xf32>
    %208 = vector.broadcast %206 : vector<1x16x128xf32> to vector<2x16x128xf32>
    %209 = arith.mulf %207, %208 : vector<2x16x128xf32>
    %210 = vector.shape_cast %199 : vector<16x128xf32> to vector<1x16x128xf32>
    %211 = vector.broadcast %205 : vector<2x1x128xf32> to vector<2x16x128xf32>
    %212 = vector.broadcast %210 : vector<1x16x128xf32> to vector<2x16x128xf32>
    %213 = arith.mulf %211, %212 : vector<2x16x128xf32>
    %214 = arith.subf %209, %213 : vector<2x16x128xf32>
    %215 = arith.addf %183, %214 : vector<2x16x128xf32>
    %216 = vector.shape_cast %199 : vector<16x128xf32> to vector<1x16x128xf32>
    %217 = vector.broadcast %202 : vector<2x1x128xf32> to vector<2x16x128xf32>
    %218 = vector.broadcast %216 : vector<1x16x128xf32> to vector<2x16x128xf32>
    %219 = arith.mulf %217, %218 : vector<2x16x128xf32>
    %220 = vector.shape_cast %196 : vector<16x128xf32> to vector<1x16x128xf32>
    %221 = vector.broadcast %205 : vector<2x1x128xf32> to vector<2x16x128xf32>
    %222 = vector.broadcast %220 : vector<1x16x128xf32> to vector<2x16x128xf32>
    %223 = arith.mulf %221, %222 : vector<2x16x128xf32>
    %224 = arith.addf %219, %223 : vector<2x16x128xf32>
    %225 = arith.addf %193, %224 : vector<2x16x128xf32>
    %c0_106 = arith.constant 0 : index
    %c7 = arith.constant 7 : index
    %c0_107 = arith.constant 0 : index
    %c0_108 = arith.constant 0 : index
    %226 = vector.load %arg2[%c0_106, %c7, %c0_107, %c0_108] : memref<2x16x16x128xbf16, #tpu.memory_space<vmem>>, vector<1x1x16x128xbf16>
    %227 = vector.shape_cast %226 : vector<1x1x16x128xbf16> to vector<16x128xbf16>
    %228 = arith.extf %227 : vector<16x128xbf16> to vector<16x128xf32>
    %c1_109 = arith.constant 1 : index
    %c7_110 = arith.constant 7 : index
    %c0_111 = arith.constant 0 : index
    %c0_112 = arith.constant 0 : index
    %229 = vector.load %arg2[%c1_109, %c7_110, %c0_111, %c0_112] : memref<2x16x16x128xbf16, #tpu.memory_space<vmem>>, vector<1x1x16x128xbf16>
    %230 = vector.shape_cast %229 : vector<1x1x16x128xbf16> to vector<16x128xbf16>
    %231 = arith.extf %230 : vector<16x128xbf16> to vector<16x128xf32>
    %c0_113 = arith.constant 0 : index
    %c7_114 = arith.constant 7 : index
    %c0_115 = arith.constant 0 : index
    %c0_116 = arith.constant 0 : index
    %232 = vector.load %arg1[%c0_113, %c7_114, %c0_115, %c0_116] : memref<2x16x2x128xf32, #tpu.memory_space<vmem>>, vector<1x1x2x128xf32>
    %233 = vector.shape_cast %232 : vector<1x1x2x128xf32> to vector<2x128xf32>
    %234 = vector.shape_cast %233 : vector<2x128xf32> to vector<2x1x128xf32>
    %c1_117 = arith.constant 1 : index
    %c7_118 = arith.constant 7 : index
    %c0_119 = arith.constant 0 : index
    %c0_120 = arith.constant 0 : index
    %235 = vector.load %arg1[%c1_117, %c7_118, %c0_119, %c0_120] : memref<2x16x2x128xf32, #tpu.memory_space<vmem>>, vector<1x1x2x128xf32>
    %236 = vector.shape_cast %235 : vector<1x1x2x128xf32> to vector<2x128xf32>
    %237 = vector.shape_cast %236 : vector<2x128xf32> to vector<2x1x128xf32>
    %238 = vector.shape_cast %228 : vector<16x128xf32> to vector<1x16x128xf32>
    %239 = vector.broadcast %234 : vector<2x1x128xf32> to vector<2x16x128xf32>
    %240 = vector.broadcast %238 : vector<1x16x128xf32> to vector<2x16x128xf32>
    %241 = arith.mulf %239, %240 : vector<2x16x128xf32>
    %242 = vector.shape_cast %231 : vector<16x128xf32> to vector<1x16x128xf32>
    %243 = vector.broadcast %237 : vector<2x1x128xf32> to vector<2x16x128xf32>
    %244 = vector.broadcast %242 : vector<1x16x128xf32> to vector<2x16x128xf32>
    %245 = arith.mulf %243, %244 : vector<2x16x128xf32>
    %246 = arith.subf %241, %245 : vector<2x16x128xf32>
    %247 = arith.addf %215, %246 : vector<2x16x128xf32>
    %248 = vector.shape_cast %231 : vector<16x128xf32> to vector<1x16x128xf32>
    %249 = vector.broadcast %234 : vector<2x1x128xf32> to vector<2x16x128xf32>
    %250 = vector.broadcast %248 : vector<1x16x128xf32> to vector<2x16x128xf32>
    %251 = arith.mulf %249, %250 : vector<2x16x128xf32>
    %252 = vector.shape_cast %228 : vector<16x128xf32> to vector<1x16x128xf32>
    %253 = vector.broadcast %237 : vector<2x1x128xf32> to vector<2x16x128xf32>
    %254 = vector.broadcast %252 : vector<1x16x128xf32> to vector<2x16x128xf32>
    %255 = arith.mulf %253, %254 : vector<2x16x128xf32>
    %256 = arith.addf %251, %255 : vector<2x16x128xf32>
    %257 = arith.addf %225, %256 : vector<2x16x128xf32>
    %c0_121 = arith.constant 0 : index
    %c8 = arith.constant 8 : index
    %c0_122 = arith.constant 0 : index
    %c0_123 = arith.constant 0 : index
    %258 = vector.load %arg2[%c0_121, %c8, %c0_122, %c0_123] : memref<2x16x16x128xbf16, #tpu.memory_space<vmem>>, vector<1x1x16x128xbf16>
    %259 = vector.shape_cast %258 : vector<1x1x16x128xbf16> to vector<16x128xbf16>
    %260 = arith.extf %259 : vector<16x128xbf16> to vector<16x128xf32>
    %c1_124 = arith.constant 1 : index
    %c8_125 = arith.constant 8 : index
    %c0_126 = arith.constant 0 : index
    %c0_127 = arith.constant 0 : index
    %261 = vector.load %arg2[%c1_124, %c8_125, %c0_126, %c0_127] : memref<2x16x16x128xbf16, #tpu.memory_space<vmem>>, vector<1x1x16x128xbf16>
    %262 = vector.shape_cast %261 : vector<1x1x16x128xbf16> to vector<16x128xbf16>
    %263 = arith.extf %262 : vector<16x128xbf16> to vector<16x128xf32>
    %c0_128 = arith.constant 0 : index
    %c8_129 = arith.constant 8 : index
    %c0_130 = arith.constant 0 : index
    %c0_131 = arith.constant 0 : index
    %264 = vector.load %arg1[%c0_128, %c8_129, %c0_130, %c0_131] : memref<2x16x2x128xf32, #tpu.memory_space<vmem>>, vector<1x1x2x128xf32>
    %265 = vector.shape_cast %264 : vector<1x1x2x128xf32> to vector<2x128xf32>
    %266 = vector.shape_cast %265 : vector<2x128xf32> to vector<2x1x128xf32>
    %c1_132 = arith.constant 1 : index
    %c8_133 = arith.constant 8 : index
    %c0_134 = arith.constant 0 : index
    %c0_135 = arith.constant 0 : index
    %267 = vector.load %arg1[%c1_132, %c8_133, %c0_134, %c0_135] : memref<2x16x2x128xf32, #tpu.memory_space<vmem>>, vector<1x1x2x128xf32>
    %268 = vector.shape_cast %267 : vector<1x1x2x128xf32> to vector<2x128xf32>
    %269 = vector.shape_cast %268 : vector<2x128xf32> to vector<2x1x128xf32>
    %270 = vector.shape_cast %260 : vector<16x128xf32> to vector<1x16x128xf32>
    %271 = vector.broadcast %266 : vector<2x1x128xf32> to vector<2x16x128xf32>
    %272 = vector.broadcast %270 : vector<1x16x128xf32> to vector<2x16x128xf32>
    %273 = arith.mulf %271, %272 : vector<2x16x128xf32>
    %274 = vector.shape_cast %263 : vector<16x128xf32> to vector<1x16x128xf32>
    %275 = vector.broadcast %269 : vector<2x1x128xf32> to vector<2x16x128xf32>
    %276 = vector.broadcast %274 : vector<1x16x128xf32> to vector<2x16x128xf32>
    %277 = arith.mulf %275, %276 : vector<2x16x128xf32>
    %278 = arith.subf %273, %277 : vector<2x16x128xf32>
    %279 = arith.addf %247, %278 : vector<2x16x128xf32>
    %280 = vector.shape_cast %263 : vector<16x128xf32> to vector<1x16x128xf32>
    %281 = vector.broadcast %266 : vector<2x1x128xf32> to vector<2x16x128xf32>
    %282 = vector.broadcast %280 : vector<1x16x128xf32> to vector<2x16x128xf32>
    %283 = arith.mulf %281, %282 : vector<2x16x128xf32>
    %284 = vector.shape_cast %260 : vector<16x128xf32> to vector<1x16x128xf32>
    %285 = vector.broadcast %269 : vector<2x1x128xf32> to vector<2x16x128xf32>
    %286 = vector.broadcast %284 : vector<1x16x128xf32> to vector<2x16x128xf32>
    %287 = arith.mulf %285, %286 : vector<2x16x128xf32>
    %288 = arith.addf %283, %287 : vector<2x16x128xf32>
    %289 = arith.addf %257, %288 : vector<2x16x128xf32>
    %c0_136 = arith.constant 0 : index
    %c9 = arith.constant 9 : index
    %c0_137 = arith.constant 0 : index
    %c0_138 = arith.constant 0 : index
    %290 = vector.load %arg2[%c0_136, %c9, %c0_137, %c0_138] : memref<2x16x16x128xbf16, #tpu.memory_space<vmem>>, vector<1x1x16x128xbf16>
    %291 = vector.shape_cast %290 : vector<1x1x16x128xbf16> to vector<16x128xbf16>
    %292 = arith.extf %291 : vector<16x128xbf16> to vector<16x128xf32>
    %c1_139 = arith.constant 1 : index
    %c9_140 = arith.constant 9 : index
    %c0_141 = arith.constant 0 : index
    %c0_142 = arith.constant 0 : index
    %293 = vector.load %arg2[%c1_139, %c9_140, %c0_141, %c0_142] : memref<2x16x16x128xbf16, #tpu.memory_space<vmem>>, vector<1x1x16x128xbf16>
    %294 = vector.shape_cast %293 : vector<1x1x16x128xbf16> to vector<16x128xbf16>
    %295 = arith.extf %294 : vector<16x128xbf16> to vector<16x128xf32>
    %c0_143 = arith.constant 0 : index
    %c9_144 = arith.constant 9 : index
    %c0_145 = arith.constant 0 : index
    %c0_146 = arith.constant 0 : index
    %296 = vector.load %arg1[%c0_143, %c9_144, %c0_145, %c0_146] : memref<2x16x2x128xf32, #tpu.memory_space<vmem>>, vector<1x1x2x128xf32>
    %297 = vector.shape_cast %296 : vector<1x1x2x128xf32> to vector<2x128xf32>
    %298 = vector.shape_cast %297 : vector<2x128xf32> to vector<2x1x128xf32>
    %c1_147 = arith.constant 1 : index
    %c9_148 = arith.constant 9 : index
    %c0_149 = arith.constant 0 : index
    %c0_150 = arith.constant 0 : index
    %299 = vector.load %arg1[%c1_147, %c9_148, %c0_149, %c0_150] : memref<2x16x2x128xf32, #tpu.memory_space<vmem>>, vector<1x1x2x128xf32>
    %300 = vector.shape_cast %299 : vector<1x1x2x128xf32> to vector<2x128xf32>
    %301 = vector.shape_cast %300 : vector<2x128xf32> to vector<2x1x128xf32>
    %302 = vector.shape_cast %292 : vector<16x128xf32> to vector<1x16x128xf32>
    %303 = vector.broadcast %298 : vector<2x1x128xf32> to vector<2x16x128xf32>
    %304 = vector.broadcast %302 : vector<1x16x128xf32> to vector<2x16x128xf32>
    %305 = arith.mulf %303, %304 : vector<2x16x128xf32>
    %306 = vector.shape_cast %295 : vector<16x128xf32> to vector<1x16x128xf32>
    %307 = vector.broadcast %301 : vector<2x1x128xf32> to vector<2x16x128xf32>
    %308 = vector.broadcast %306 : vector<1x16x128xf32> to vector<2x16x128xf32>
    %309 = arith.mulf %307, %308 : vector<2x16x128xf32>
    %310 = arith.subf %305, %309 : vector<2x16x128xf32>
    %311 = arith.addf %279, %310 : vector<2x16x128xf32>
    %312 = vector.shape_cast %295 : vector<16x128xf32> to vector<1x16x128xf32>
    %313 = vector.broadcast %298 : vector<2x1x128xf32> to vector<2x16x128xf32>
    %314 = vector.broadcast %312 : vector<1x16x128xf32> to vector<2x16x128xf32>
    %315 = arith.mulf %313, %314 : vector<2x16x128xf32>
    %316 = vector.shape_cast %292 : vector<16x128xf32> to vector<1x16x128xf32>
    %317 = vector.broadcast %301 : vector<2x1x128xf32> to vector<2x16x128xf32>
    %318 = vector.broadcast %316 : vector<1x16x128xf32> to vector<2x16x128xf32>
    %319 = arith.mulf %317, %318 : vector<2x16x128xf32>
    %320 = arith.addf %315, %319 : vector<2x16x128xf32>
    %321 = arith.addf %289, %320 : vector<2x16x128xf32>
    %c0_151 = arith.constant 0 : index
    %c10 = arith.constant 10 : index
    %c0_152 = arith.constant 0 : index
    %c0_153 = arith.constant 0 : index
    %322 = vector.load %arg2[%c0_151, %c10, %c0_152, %c0_153] : memref<2x16x16x128xbf16, #tpu.memory_space<vmem>>, vector<1x1x16x128xbf16>
    %323 = vector.shape_cast %322 : vector<1x1x16x128xbf16> to vector<16x128xbf16>
    %324 = arith.extf %323 : vector<16x128xbf16> to vector<16x128xf32>
    %c1_154 = arith.constant 1 : index
    %c10_155 = arith.constant 10 : index
    %c0_156 = arith.constant 0 : index
    %c0_157 = arith.constant 0 : index
    %325 = vector.load %arg2[%c1_154, %c10_155, %c0_156, %c0_157] : memref<2x16x16x128xbf16, #tpu.memory_space<vmem>>, vector<1x1x16x128xbf16>
    %326 = vector.shape_cast %325 : vector<1x1x16x128xbf16> to vector<16x128xbf16>
    %327 = arith.extf %326 : vector<16x128xbf16> to vector<16x128xf32>
    %c0_158 = arith.constant 0 : index
    %c10_159 = arith.constant 10 : index
    %c0_160 = arith.constant 0 : index
    %c0_161 = arith.constant 0 : index
    %328 = vector.load %arg1[%c0_158, %c10_159, %c0_160, %c0_161] : memref<2x16x2x128xf32, #tpu.memory_space<vmem>>, vector<1x1x2x128xf32>
    %329 = vector.shape_cast %328 : vector<1x1x2x128xf32> to vector<2x128xf32>
    %330 = vector.shape_cast %329 : vector<2x128xf32> to vector<2x1x128xf32>
    %c1_162 = arith.constant 1 : index
    %c10_163 = arith.constant 10 : index
    %c0_164 = arith.constant 0 : index
    %c0_165 = arith.constant 0 : index
    %331 = vector.load %arg1[%c1_162, %c10_163, %c0_164, %c0_165] : memref<2x16x2x128xf32, #tpu.memory_space<vmem>>, vector<1x1x2x128xf32>
    %332 = vector.shape_cast %331 : vector<1x1x2x128xf32> to vector<2x128xf32>
    %333 = vector.shape_cast %332 : vector<2x128xf32> to vector<2x1x128xf32>
    %334 = vector.shape_cast %324 : vector<16x128xf32> to vector<1x16x128xf32>
    %335 = vector.broadcast %330 : vector<2x1x128xf32> to vector<2x16x128xf32>
    %336 = vector.broadcast %334 : vector<1x16x128xf32> to vector<2x16x128xf32>
    %337 = arith.mulf %335, %336 : vector<2x16x128xf32>
    %338 = vector.shape_cast %327 : vector<16x128xf32> to vector<1x16x128xf32>
    %339 = vector.broadcast %333 : vector<2x1x128xf32> to vector<2x16x128xf32>
    %340 = vector.broadcast %338 : vector<1x16x128xf32> to vector<2x16x128xf32>
    %341 = arith.mulf %339, %340 : vector<2x16x128xf32>
    %342 = arith.subf %337, %341 : vector<2x16x128xf32>
    %343 = arith.addf %311, %342 : vector<2x16x128xf32>
    %344 = vector.shape_cast %327 : vector<16x128xf32> to vector<1x16x128xf32>
    %345 = vector.broadcast %330 : vector<2x1x128xf32> to vector<2x16x128xf32>
    %346 = vector.broadcast %344 : vector<1x16x128xf32> to vector<2x16x128xf32>
    %347 = arith.mulf %345, %346 : vector<2x16x128xf32>
    %348 = vector.shape_cast %324 : vector<16x128xf32> to vector<1x16x128xf32>
    %349 = vector.broadcast %333 : vector<2x1x128xf32> to vector<2x16x128xf32>
    %350 = vector.broadcast %348 : vector<1x16x128xf32> to vector<2x16x128xf32>
    %351 = arith.mulf %349, %350 : vector<2x16x128xf32>
    %352 = arith.addf %347, %351 : vector<2x16x128xf32>
    %353 = arith.addf %321, %352 : vector<2x16x128xf32>
    %c0_166 = arith.constant 0 : index
    %c11 = arith.constant 11 : index
    %c0_167 = arith.constant 0 : index
    %c0_168 = arith.constant 0 : index
    %354 = vector.load %arg2[%c0_166, %c11, %c0_167, %c0_168] : memref<2x16x16x128xbf16, #tpu.memory_space<vmem>>, vector<1x1x16x128xbf16>
    %355 = vector.shape_cast %354 : vector<1x1x16x128xbf16> to vector<16x128xbf16>
    %356 = arith.extf %355 : vector<16x128xbf16> to vector<16x128xf32>
    %c1_169 = arith.constant 1 : index
    %c11_170 = arith.constant 11 : index
    %c0_171 = arith.constant 0 : index
    %c0_172 = arith.constant 0 : index
    %357 = vector.load %arg2[%c1_169, %c11_170, %c0_171, %c0_172] : memref<2x16x16x128xbf16, #tpu.memory_space<vmem>>, vector<1x1x16x128xbf16>
    %358 = vector.shape_cast %357 : vector<1x1x16x128xbf16> to vector<16x128xbf16>
    %359 = arith.extf %358 : vector<16x128xbf16> to vector<16x128xf32>
    %c0_173 = arith.constant 0 : index
    %c11_174 = arith.constant 11 : index
    %c0_175 = arith.constant 0 : index
    %c0_176 = arith.constant 0 : index
    %360 = vector.load %arg1[%c0_173, %c11_174, %c0_175, %c0_176] : memref<2x16x2x128xf32, #tpu.memory_space<vmem>>, vector<1x1x2x128xf32>
    %361 = vector.shape_cast %360 : vector<1x1x2x128xf32> to vector<2x128xf32>
    %362 = vector.shape_cast %361 : vector<2x128xf32> to vector<2x1x128xf32>
    %c1_177 = arith.constant 1 : index
    %c11_178 = arith.constant 11 : index
    %c0_179 = arith.constant 0 : index
    %c0_180 = arith.constant 0 : index
    %363 = vector.load %arg1[%c1_177, %c11_178, %c0_179, %c0_180] : memref<2x16x2x128xf32, #tpu.memory_space<vmem>>, vector<1x1x2x128xf32>
    %364 = vector.shape_cast %363 : vector<1x1x2x128xf32> to vector<2x128xf32>
    %365 = vector.shape_cast %364 : vector<2x128xf32> to vector<2x1x128xf32>
    %366 = vector.shape_cast %356 : vector<16x128xf32> to vector<1x16x128xf32>
    %367 = vector.broadcast %362 : vector<2x1x128xf32> to vector<2x16x128xf32>
    %368 = vector.broadcast %366 : vector<1x16x128xf32> to vector<2x16x128xf32>
    %369 = arith.mulf %367, %368 : vector<2x16x128xf32>
    %370 = vector.shape_cast %359 : vector<16x128xf32> to vector<1x16x128xf32>
    %371 = vector.broadcast %365 : vector<2x1x128xf32> to vector<2x16x128xf32>
    %372 = vector.broadcast %370 : vector<1x16x128xf32> to vector<2x16x128xf32>
    %373 = arith.mulf %371, %372 : vector<2x16x128xf32>
    %374 = arith.subf %369, %373 : vector<2x16x128xf32>
    %375 = arith.addf %343, %374 : vector<2x16x128xf32>
    %376 = vector.shape_cast %359 : vector<16x128xf32> to vector<1x16x128xf32>
    %377 = vector.broadcast %362 : vector<2x1x128xf32> to vector<2x16x128xf32>
    %378 = vector.broadcast %376 : vector<1x16x128xf32> to vector<2x16x128xf32>
    %379 = arith.mulf %377, %378 : vector<2x16x128xf32>
    %380 = vector.shape_cast %356 : vector<16x128xf32> to vector<1x16x128xf32>
    %381 = vector.broadcast %365 : vector<2x1x128xf32> to vector<2x16x128xf32>
    %382 = vector.broadcast %380 : vector<1x16x128xf32> to vector<2x16x128xf32>
    %383 = arith.mulf %381, %382 : vector<2x16x128xf32>
    %384 = arith.addf %379, %383 : vector<2x16x128xf32>
    %385 = arith.addf %353, %384 : vector<2x16x128xf32>
    %c0_181 = arith.constant 0 : index
    %c12 = arith.constant 12 : index
    %c0_182 = arith.constant 0 : index
    %c0_183 = arith.constant 0 : index
    %386 = vector.load %arg2[%c0_181, %c12, %c0_182, %c0_183] : memref<2x16x16x128xbf16, #tpu.memory_space<vmem>>, vector<1x1x16x128xbf16>
    %387 = vector.shape_cast %386 : vector<1x1x16x128xbf16> to vector<16x128xbf16>
    %388 = arith.extf %387 : vector<16x128xbf16> to vector<16x128xf32>
    %c1_184 = arith.constant 1 : index
    %c12_185 = arith.constant 12 : index
    %c0_186 = arith.constant 0 : index
    %c0_187 = arith.constant 0 : index
    %389 = vector.load %arg2[%c1_184, %c12_185, %c0_186, %c0_187] : memref<2x16x16x128xbf16, #tpu.memory_space<vmem>>, vector<1x1x16x128xbf16>
    %390 = vector.shape_cast %389 : vector<1x1x16x128xbf16> to vector<16x128xbf16>
    %391 = arith.extf %390 : vector<16x128xbf16> to vector<16x128xf32>
    %c0_188 = arith.constant 0 : index
    %c12_189 = arith.constant 12 : index
    %c0_190 = arith.constant 0 : index
    %c0_191 = arith.constant 0 : index
    %392 = vector.load %arg1[%c0_188, %c12_189, %c0_190, %c0_191] : memref<2x16x2x128xf32, #tpu.memory_space<vmem>>, vector<1x1x2x128xf32>
    %393 = vector.shape_cast %392 : vector<1x1x2x128xf32> to vector<2x128xf32>
    %394 = vector.shape_cast %393 : vector<2x128xf32> to vector<2x1x128xf32>
    %c1_192 = arith.constant 1 : index
    %c12_193 = arith.constant 12 : index
    %c0_194 = arith.constant 0 : index
    %c0_195 = arith.constant 0 : index
    %395 = vector.load %arg1[%c1_192, %c12_193, %c0_194, %c0_195] : memref<2x16x2x128xf32, #tpu.memory_space<vmem>>, vector<1x1x2x128xf32>
    %396 = vector.shape_cast %395 : vector<1x1x2x128xf32> to vector<2x128xf32>
    %397 = vector.shape_cast %396 : vector<2x128xf32> to vector<2x1x128xf32>
    %398 = vector.shape_cast %388 : vector<16x128xf32> to vector<1x16x128xf32>
    %399 = vector.broadcast %394 : vector<2x1x128xf32> to vector<2x16x128xf32>
    %400 = vector.broadcast %398 : vector<1x16x128xf32> to vector<2x16x128xf32>
    %401 = arith.mulf %399, %400 : vector<2x16x128xf32>
    %402 = vector.shape_cast %391 : vector<16x128xf32> to vector<1x16x128xf32>
    %403 = vector.broadcast %397 : vector<2x1x128xf32> to vector<2x16x128xf32>
    %404 = vector.broadcast %402 : vector<1x16x128xf32> to vector<2x16x128xf32>
    %405 = arith.mulf %403, %404 : vector<2x16x128xf32>
    %406 = arith.subf %401, %405 : vector<2x16x128xf32>
    %407 = arith.addf %375, %406 : vector<2x16x128xf32>
    %408 = vector.shape_cast %391 : vector<16x128xf32> to vector<1x16x128xf32>
    %409 = vector.broadcast %394 : vector<2x1x128xf32> to vector<2x16x128xf32>
    %410 = vector.broadcast %408 : vector<1x16x128xf32> to vector<2x16x128xf32>
    %411 = arith.mulf %409, %410 : vector<2x16x128xf32>
    %412 = vector.shape_cast %388 : vector<16x128xf32> to vector<1x16x128xf32>
    %413 = vector.broadcast %397 : vector<2x1x128xf32> to vector<2x16x128xf32>
    %414 = vector.broadcast %412 : vector<1x16x128xf32> to vector<2x16x128xf32>
    %415 = arith.mulf %413, %414 : vector<2x16x128xf32>
    %416 = arith.addf %411, %415 : vector<2x16x128xf32>
    %417 = arith.addf %385, %416 : vector<2x16x128xf32>
    %c0_196 = arith.constant 0 : index
    %c13 = arith.constant 13 : index
    %c0_197 = arith.constant 0 : index
    %c0_198 = arith.constant 0 : index
    %418 = vector.load %arg2[%c0_196, %c13, %c0_197, %c0_198] : memref<2x16x16x128xbf16, #tpu.memory_space<vmem>>, vector<1x1x16x128xbf16>
    %419 = vector.shape_cast %418 : vector<1x1x16x128xbf16> to vector<16x128xbf16>
    %420 = arith.extf %419 : vector<16x128xbf16> to vector<16x128xf32>
    %c1_199 = arith.constant 1 : index
    %c13_200 = arith.constant 13 : index
    %c0_201 = arith.constant 0 : index
    %c0_202 = arith.constant 0 : index
    %421 = vector.load %arg2[%c1_199, %c13_200, %c0_201, %c0_202] : memref<2x16x16x128xbf16, #tpu.memory_space<vmem>>, vector<1x1x16x128xbf16>
    %422 = vector.shape_cast %421 : vector<1x1x16x128xbf16> to vector<16x128xbf16>
    %423 = arith.extf %422 : vector<16x128xbf16> to vector<16x128xf32>
    %c0_203 = arith.constant 0 : index
    %c13_204 = arith.constant 13 : index
    %c0_205 = arith.constant 0 : index
    %c0_206 = arith.constant 0 : index
    %424 = vector.load %arg1[%c0_203, %c13_204, %c0_205, %c0_206] : memref<2x16x2x128xf32, #tpu.memory_space<vmem>>, vector<1x1x2x128xf32>
    %425 = vector.shape_cast %424 : vector<1x1x2x128xf32> to vector<2x128xf32>
    %426 = vector.shape_cast %425 : vector<2x128xf32> to vector<2x1x128xf32>
    %c1_207 = arith.constant 1 : index
    %c13_208 = arith.constant 13 : index
    %c0_209 = arith.constant 0 : index
    %c0_210 = arith.constant 0 : index
    %427 = vector.load %arg1[%c1_207, %c13_208, %c0_209, %c0_210] : memref<2x16x2x128xf32, #tpu.memory_space<vmem>>, vector<1x1x2x128xf32>
    %428 = vector.shape_cast %427 : vector<1x1x2x128xf32> to vector<2x128xf32>
    %429 = vector.shape_cast %428 : vector<2x128xf32> to vector<2x1x128xf32>
    %430 = vector.shape_cast %420 : vector<16x128xf32> to vector<1x16x128xf32>
    %431 = vector.broadcast %426 : vector<2x1x128xf32> to vector<2x16x128xf32>
    %432 = vector.broadcast %430 : vector<1x16x128xf32> to vector<2x16x128xf32>
    %433 = arith.mulf %431, %432 : vector<2x16x128xf32>
    %434 = vector.shape_cast %423 : vector<16x128xf32> to vector<1x16x128xf32>
    %435 = vector.broadcast %429 : vector<2x1x128xf32> to vector<2x16x128xf32>
    %436 = vector.broadcast %434 : vector<1x16x128xf32> to vector<2x16x128xf32>
    %437 = arith.mulf %435, %436 : vector<2x16x128xf32>
    %438 = arith.subf %433, %437 : vector<2x16x128xf32>
    %439 = arith.addf %407, %438 : vector<2x16x128xf32>
    %440 = vector.shape_cast %423 : vector<16x128xf32> to vector<1x16x128xf32>
    %441 = vector.broadcast %426 : vector<2x1x128xf32> to vector<2x16x128xf32>
    %442 = vector.broadcast %440 : vector<1x16x128xf32> to vector<2x16x128xf32>
    %443 = arith.mulf %441, %442 : vector<2x16x128xf32>
    %444 = vector.shape_cast %420 : vector<16x128xf32> to vector<1x16x128xf32>
    %445 = vector.broadcast %429 : vector<2x1x128xf32> to vector<2x16x128xf32>
    %446 = vector.broadcast %444 : vector<1x16x128xf32> to vector<2x16x128xf32>
    %447 = arith.mulf %445, %446 : vector<2x16x128xf32>
    %448 = arith.addf %443, %447 : vector<2x16x128xf32>
    %449 = arith.addf %417, %448 : vector<2x16x128xf32>
    %c0_211 = arith.constant 0 : index
    %c14 = arith.constant 14 : index
    %c0_212 = arith.constant 0 : index
    %c0_213 = arith.constant 0 : index
    %450 = vector.load %arg2[%c0_211, %c14, %c0_212, %c0_213] : memref<2x16x16x128xbf16, #tpu.memory_space<vmem>>, vector<1x1x16x128xbf16>
    %451 = vector.shape_cast %450 : vector<1x1x16x128xbf16> to vector<16x128xbf16>
    %452 = arith.extf %451 : vector<16x128xbf16> to vector<16x128xf32>
    %c1_214 = arith.constant 1 : index
    %c14_215 = arith.constant 14 : index
    %c0_216 = arith.constant 0 : index
    %c0_217 = arith.constant 0 : index
    %453 = vector.load %arg2[%c1_214, %c14_215, %c0_216, %c0_217] : memref<2x16x16x128xbf16, #tpu.memory_space<vmem>>, vector<1x1x16x128xbf16>
    %454 = vector.shape_cast %453 : vector<1x1x16x128xbf16> to vector<16x128xbf16>
    %455 = arith.extf %454 : vector<16x128xbf16> to vector<16x128xf32>
    %c0_218 = arith.constant 0 : index
    %c14_219 = arith.constant 14 : index
    %c0_220 = arith.constant 0 : index
    %c0_221 = arith.constant 0 : index
    %456 = vector.load %arg1[%c0_218, %c14_219, %c0_220, %c0_221] : memref<2x16x2x128xf32, #tpu.memory_space<vmem>>, vector<1x1x2x128xf32>
    %457 = vector.shape_cast %456 : vector<1x1x2x128xf32> to vector<2x128xf32>
    %458 = vector.shape_cast %457 : vector<2x128xf32> to vector<2x1x128xf32>
    %c1_222 = arith.constant 1 : index
    %c14_223 = arith.constant 14 : index
    %c0_224 = arith.constant 0 : index
    %c0_225 = arith.constant 0 : index
    %459 = vector.load %arg1[%c1_222, %c14_223, %c0_224, %c0_225] : memref<2x16x2x128xf32, #tpu.memory_space<vmem>>, vector<1x1x2x128xf32>
    %460 = vector.shape_cast %459 : vector<1x1x2x128xf32> to vector<2x128xf32>
    %461 = vector.shape_cast %460 : vector<2x128xf32> to vector<2x1x128xf32>
    %462 = vector.shape_cast %452 : vector<16x128xf32> to vector<1x16x128xf32>
    %463 = vector.broadcast %458 : vector<2x1x128xf32> to vector<2x16x128xf32>
    %464 = vector.broadcast %462 : vector<1x16x128xf32> to vector<2x16x128xf32>
    %465 = arith.mulf %463, %464 : vector<2x16x128xf32>
    %466 = vector.shape_cast %455 : vector<16x128xf32> to vector<1x16x128xf32>
    %467 = vector.broadcast %461 : vector<2x1x128xf32> to vector<2x16x128xf32>
    %468 = vector.broadcast %466 : vector<1x16x128xf32> to vector<2x16x128xf32>
    %469 = arith.mulf %467, %468 : vector<2x16x128xf32>
    %470 = arith.subf %465, %469 : vector<2x16x128xf32>
    %471 = arith.addf %439, %470 : vector<2x16x128xf32>
    %472 = vector.shape_cast %455 : vector<16x128xf32> to vector<1x16x128xf32>
    %473 = vector.broadcast %458 : vector<2x1x128xf32> to vector<2x16x128xf32>
    %474 = vector.broadcast %472 : vector<1x16x128xf32> to vector<2x16x128xf32>
    %475 = arith.mulf %473, %474 : vector<2x16x128xf32>
    %476 = vector.shape_cast %452 : vector<16x128xf32> to vector<1x16x128xf32>
    %477 = vector.broadcast %461 : vector<2x1x128xf32> to vector<2x16x128xf32>
    %478 = vector.broadcast %476 : vector<1x16x128xf32> to vector<2x16x128xf32>
    %479 = arith.mulf %477, %478 : vector<2x16x128xf32>
    %480 = arith.addf %475, %479 : vector<2x16x128xf32>
    %481 = arith.addf %449, %480 : vector<2x16x128xf32>
    %c0_226 = arith.constant 0 : index
    %c15 = arith.constant 15 : index
    %c0_227 = arith.constant 0 : index
    %c0_228 = arith.constant 0 : index
    %482 = vector.load %arg2[%c0_226, %c15, %c0_227, %c0_228] : memref<2x16x16x128xbf16, #tpu.memory_space<vmem>>, vector<1x1x16x128xbf16>
    %483 = vector.shape_cast %482 : vector<1x1x16x128xbf16> to vector<16x128xbf16>
    %484 = arith.extf %483 : vector<16x128xbf16> to vector<16x128xf32>
    %c1_229 = arith.constant 1 : index
    %c15_230 = arith.constant 15 : index
    %c0_231 = arith.constant 0 : index
    %c0_232 = arith.constant 0 : index
    %485 = vector.load %arg2[%c1_229, %c15_230, %c0_231, %c0_232] : memref<2x16x16x128xbf16, #tpu.memory_space<vmem>>, vector<1x1x16x128xbf16>
    %486 = vector.shape_cast %485 : vector<1x1x16x128xbf16> to vector<16x128xbf16>
    %487 = arith.extf %486 : vector<16x128xbf16> to vector<16x128xf32>
    %c0_233 = arith.constant 0 : index
    %c15_234 = arith.constant 15 : index
    %c0_235 = arith.constant 0 : index
    %c0_236 = arith.constant 0 : index
    %488 = vector.load %arg1[%c0_233, %c15_234, %c0_235, %c0_236] : memref<2x16x2x128xf32, #tpu.memory_space<vmem>>, vector<1x1x2x128xf32>
    %489 = vector.shape_cast %488 : vector<1x1x2x128xf32> to vector<2x128xf32>
    %490 = vector.shape_cast %489 : vector<2x128xf32> to vector<2x1x128xf32>
    %c1_237 = arith.constant 1 : index
    %c15_238 = arith.constant 15 : index
    %c0_239 = arith.constant 0 : index
    %c0_240 = arith.constant 0 : index
    %491 = vector.load %arg1[%c1_237, %c15_238, %c0_239, %c0_240] : memref<2x16x2x128xf32, #tpu.memory_space<vmem>>, vector<1x1x2x128xf32>
    %492 = vector.shape_cast %491 : vector<1x1x2x128xf32> to vector<2x128xf32>
    %493 = vector.shape_cast %492 : vector<2x128xf32> to vector<2x1x128xf32>
    %494 = vector.shape_cast %484 : vector<16x128xf32> to vector<1x16x128xf32>
    %495 = vector.broadcast %490 : vector<2x1x128xf32> to vector<2x16x128xf32>
    %496 = vector.broadcast %494 : vector<1x16x128xf32> to vector<2x16x128xf32>
    %497 = arith.mulf %495, %496 : vector<2x16x128xf32>
    %498 = vector.shape_cast %487 : vector<16x128xf32> to vector<1x16x128xf32>
    %499 = vector.broadcast %493 : vector<2x1x128xf32> to vector<2x16x128xf32>
    %500 = vector.broadcast %498 : vector<1x16x128xf32> to vector<2x16x128xf32>
    %501 = arith.mulf %499, %500 : vector<2x16x128xf32>
    %502 = arith.subf %497, %501 : vector<2x16x128xf32>
    %503 = arith.addf %471, %502 : vector<2x16x128xf32>
    %504 = vector.shape_cast %487 : vector<16x128xf32> to vector<1x16x128xf32>
    %505 = vector.broadcast %490 : vector<2x1x128xf32> to vector<2x16x128xf32>
    %506 = vector.broadcast %504 : vector<1x16x128xf32> to vector<2x16x128xf32>
    %507 = arith.mulf %505, %506 : vector<2x16x128xf32>
    %508 = vector.shape_cast %484 : vector<16x128xf32> to vector<1x16x128xf32>
    %509 = vector.broadcast %493 : vector<2x1x128xf32> to vector<2x16x128xf32>
    %510 = vector.broadcast %508 : vector<1x16x128xf32> to vector<2x16x128xf32>
    %511 = arith.mulf %509, %510 : vector<2x16x128xf32>
    %512 = arith.addf %507, %511 : vector<2x16x128xf32>
    %513 = arith.addf %481, %512 : vector<2x16x128xf32>
    %c0_241 = arith.constant 0 : index
    %c0_242 = arith.constant 0 : index
    %c0_243 = arith.constant 0 : index
    %c0_244 = arith.constant 0 : index
    %514 = vector.load %arg3[%c0_241, %c0_242, %c0_243, %c0_244] : memref<2x2x16x128xf32, #tpu.memory_space<vmem>>, vector<1x2x16x128xf32>
    %515 = vector.shape_cast %514 : vector<1x2x16x128xf32> to vector<2x16x128xf32>
    %516 = vector.shape_cast %503 : vector<2x16x128xf32> to vector<1x2x16x128xf32>
    tpu.vector_store %arg3[%c0_241, %c0_242, %c0_243, %c0_244], %516 {strides = array<i32>} : memref<2x2x16x128xf32, #tpu.memory_space<vmem>>, vector<1x2x16x128xf32>,
    %c1_245 = arith.constant 1 : index
    %c0_246 = arith.constant 0 : index
    %c0_247 = arith.constant 0 : index
    %c0_248 = arith.constant 0 : index
    %517 = vector.load %arg3[%c1_245, %c0_246, %c0_247, %c0_248] : memref<2x2x16x128xf32, #tpu.memory_space<vmem>>, vector<1x2x16x128xf32>
    %518 = vector.shape_cast %517 : vector<1x2x16x128xf32> to vector<2x16x128xf32>
    %519 = vector.shape_cast %513 : vector<2x16x128xf32> to vector<1x2x16x128xf32>
    tpu.vector_store %arg3[%c1_245, %c0_246, %c0_247, %c0_248], %519 {strides = array<i32>} : memref<2x2x16x128xf32, #tpu.memory_space<vmem>>, vector<1x2x16x128xf32>,
    return
  }
  func.func @transform_0(%arg0: i32) -> (i32, i32, i32, i32) {
    %c0_i32 = arith.constant 0 : i32
    %c0_i32_0 = arith.constant 0 : i32
    %c0_i32_1 = arith.constant 0 : i32
    %c0_i32_2 = arith.constant 0 : i32
    return %c0_i32, %c0_i32_0, %c0_i32_1, %arg0 : i32, i32, i32, i32
  }
  func.func @transform_1(%arg0: i32) -> (i32, i32, i32, i32) {
    %c0_i32 = arith.constant 0 : i32
    %c0_i32_0 = arith.constant 0 : i32
    %c0_i32_1 = arith.constant 0 : i32
    %c0_i32_2 = arith.constant 0 : i32
    return %c0_i32, %c0_i32_0, %c0_i32_1, %arg0 : i32, i32, i32, i32
  }
  func.func @transform_2(%arg0: i32) -> (i32, i32, i32, i32) {
    %c0_i32 = arith.constant 0 : i32
    %c0_i32_0 = arith.constant 0 : i32
    %c0_i32_1 = arith.constant 0 : i32
    %c0_i32_2 = arith.constant 0 : i32
    return %c0_i32, %c0_i32_0, %c0_i32_1, %arg0 : i32, i32, i32, i32
  }
}

</mosaic_0001>

<llo_original>
// kernel: reverse.0
$region0: #{reverse.0}
  %s0 = inlined_call_operand.vmem [shape: f32[2,16,7], index: 0, kind: input, shape index: {}]
  %s1 = inlined_call_operand.vmem [shape: f32[2,16,7], index: 1, kind: output, shape index: {}]
  %v2 = vlaneseq
  %v3 = vsub.s32 6, %v2
  %4 = vset.pattern.permute.xlu0 %v3
  $region1: #{reverse.0} parent=0
    #allocation0 [shape = 'u8[16384]{0}', space=vmem, size = 0x4000, scoped, tag = 'operand span for operand 0']
    #allocation1 [shape = 'u8[16384]{0}', space=vmem, size = 0x4000, scoped, tag = 'operand span for operand 1']
    // Predicated region
    $region2: #{reverse.0} parent=1 // pred_check
      _
    $region3: #{reverse.0} parent=1 // pred_check_branch
      %6 = sbr.rel (0) target = $region5
    $region4: #{reverse.0} parent=1 // pred_region
      // Predicated region
      $region6: #{reverse.0} parent=4 // pred_check
        _
      $region7: #{reverse.0} parent=4 // pred_check_branch
        %8 = sbr.rel (0) target = $region9
      $region8: #{reverse.0} parent=4 // pred_region
        // Predicated region
        $region21: #{reverse.0} parent=8 // pred_check
          _
        $region22: #{reverse.0} parent=8 // pred_check_branch
          %30 = sbr.rel (0) target = $region24
        $region23: #{reverse.0} parent=8 // pred_region
          loop: start=0, step=1, limit=1
          $region25: #{reverse.0} parent=23 // loop_pre_header
            _
          $region26: #{reverse.0} parent=23 // loop_header
            %s32 = sphi 0, %s36
            %p33 = scmp.ge.s32.totalorder %s32, 1
            %s37 = sphi %s0, %s0
            %s38 = sphi [#allocation0], [#allocation0]
          $region27: #{reverse.0} parent=23 // loop_header_branch
            %35 = sbr.rel (%p33) target = $region31
          $region28: #{reverse.0} parent=23 // loop_body
            %v39 = vld [vmem:[%s37] sm:$0xff]
            %40 = vst [vmem:[%s38] sm:$0xff] %v39
            %v41 = vld [vmem:[%s37 + $0x8] sm:$0xff]
            %42 = vst [vmem:[%s38 + $0x8] sm:$0xff] %v41
            %v43 = vld [vmem:[%s37 + $0x10] sm:$0xff]
            %44 = vst [vmem:[%s38 + $0x10] sm:$0xff] %v43
            %v45 = vld [vmem:[%s37 + $0x18] sm:$0xff]
            %46 = vst [vmem:[%s38 + $0x18] sm:$0xff] %v45
          $region29: #{reverse.0} parent=23 // loop_footer
            %s36 = sadd.s32 1, %s32
          $region30: #{reverse.0} parent=23 // loop_footer_branch
            %31 = sbr.rel target = $region26
          $region31: #{reverse.0} parent=23 // loop_exit
            _
        $region24: #{reverse.0} parent=8 // pred_fallthru
          _
        // Predicated region
        $region32: #{reverse.0} parent=8 // pred_check
          _
        $region33: #{reverse.0} parent=8 // pred_check_branch
          %48 = sbr.rel target = $region35
        $region34: #{reverse.0} parent=8 // pred_region
          _
        $region35: #{reverse.0} parent=8 // pred_fallthru
          _
      $region9: #{reverse.0} parent=4 // pred_fallthru
        _
      // Predicated region
      $region10: #{reverse.0} parent=4 // pred_check
        _
      $region11: #{reverse.0} parent=4 // pred_check_branch
        %10 = sbr.rel target = $region13
      $region12: #{reverse.0} parent=4 // pred_region
        %s12 = ssub.s32 256, 1
        loop: start=0, step=1, limit=1
        $region14: #{reverse.0} parent=12 // loop_pre_header
          _
        $region15: #{reverse.0} parent=12 // loop_header
          %s14 = sphi 0, %s18
          %p15 = scmp.ge.s32.totalorder %s14, 1
          %s19 = sphi %s0, %s0
          %s20 = sphi [#allocation0], [#allocation0]
        $region16: #{reverse.0} parent=12 // loop_header_branch
          %17 = sbr.rel (%p15) target = $region20
        $region17: #{reverse.0} parent=12 // loop_body
          %v21 = vld [vmem:[%s19] sm:%s12]
          %22 = vst [vmem:[%s20] sm:%s12] %v21
          %v23 = vld [vmem:[%s19 + $0x8] sm:%s12]
          %24 = vst [vmem:[%s20 + $0x8] sm:%s12] %v23
          %v25 = vld [vmem:[%s19 + $0x10] sm:%s12]
          %26 = vst [vmem:[%s20 + $0x10] sm:%s12] %v25
          %v27 = vld [vmem:[%s19 + $0x18] sm:%s12]
          %28 = vst [vmem:[%s20 + $0x18] sm:%s12] %v27
        $region18: #{reverse.0} parent=12 // loop_footer
          %s18 = sadd.s32 1, %s14
        $region19: #{reverse.0} parent=12 // loop_footer_branch
          %13 = sbr.rel target = $region15
        $region20: #{reverse.0} parent=12 // loop_exit
          _
      $region13: #{reverse.0} parent=4 // pred_fallthru
        _
    $region5: #{reverse.0} parent=1 // pred_fallthru
      _
    %49 = vnop
    %v50 = vld [vmem:[#allocation0] sm:$0xff]
    %51 = vperm.xlu0 %4, %v50
    %v52 = vpop.permute.xlu0 %51
    %53 = vst [vmem:[#allocation1] sm:$0xff] %v52
    %s54 = scalar_lea.vmem [#allocation1], 8
    %s55 = scalar_lea.vmem [#allocation0], 8
    %v56 = vld [vmem:[%s55] sm:$0xff]
    %57 = vperm.xlu0 %4, %v56
    %v58 = vpop.permute.xlu0 %57
    %59 = vst [vmem:[%s54] sm:$0xff] %v58
    %s60 = scalar_lea.vmem [#allocation1], 16
    %s61 = scalar_lea.vmem [#allocation0], 16
    %v62 = vld [vmem:[%s61] sm:$0xff]
    %63 = vperm.xlu0 %4, %v62
    %v64 = vpop.permute.xlu0 %63
    %65 = vst [vmem:[%s60] sm:$0xff] %v64
    %s66 = scalar_lea.vmem %s60, 8 [#allocation1]
    %s67 = scalar_lea.vmem %s61, 8 [#allocation0]
    %v68 = vld [vmem:[%s67] sm:$0xff]
    %69 = vperm.xlu0 %4, %v68
    %v70 = vpop.permute.xlu0 %69
    %71 = vst [vmem:[%s66] sm:$0xff] %v70
    // Predicated region
    $region36: #{reverse.0} parent=1 // pred_check
      _
    $region37: #{reverse.0} parent=1 // pred_check_branch
      %73 = sbr.rel (0) target = $region39
    $region38: #{reverse.0} parent=1 // pred_region
      // Predicated region
      $region40: #{reverse.0} parent=38 // pred_check
        _
      $region41: #{reverse.0} parent=38 // pred_check_branch
        %75 = sbr.rel (0) target = $region43
      $region42: #{reverse.0} parent=38 // pred_region
        // Predicated region
        $region55: #{reverse.0} parent=42 // pred_check
          _
        $region56: #{reverse.0} parent=42 // pred_check_branch
          %97 = sbr.rel (0) target = $region58
        $region57: #{reverse.0} parent=42 // pred_region
          loop: start=0, step=1, limit=1
          $region59: #{reverse.0} parent=57 // loop_pre_header
            _
          $region60: #{reverse.0} parent=57 // loop_header
            %s99 = sphi 0, %s103
            %p100 = scmp.ge.s32.totalorder %s99, 1
            %s104 = sphi [#allocation1], [#allocation1]
            %s105 = sphi %s1, %s1
          $region61: #{reverse.0} parent=57 // loop_header_branch
            %102 = sbr.rel (%p100) target = $region65
          $region62: #{reverse.0} parent=57 // loop_body
            %v106 = vld [vmem:[%s104] sm:$0xff]
            %107 = vst [vmem:[%s105] sm:$0xff] %v106
            %v108 = vld [vmem:[%s104 + $0x8] sm:$0xff]
            %109 = vst [vmem:[%s105 + $0x8] sm:$0xff] %v108
            %v110 = vld [vmem:[%s104 + $0x10] sm:$0xff]
            %111 = vst [vmem:[%s105 + $0x10] sm:$0xff] %v110
            %v112 = vld [vmem:[%s104 + $0x18] sm:$0xff]
            %113 = vst [vmem:[%s105 + $0x18] sm:$0xff] %v112
          $region63: #{reverse.0} parent=57 // loop_footer
            %s103 = sadd.s32 1, %s99
          $region64: #{reverse.0} parent=57 // loop_footer_branch
            %98 = sbr.rel target = $region60
          $region65: #{reverse.0} parent=57 // loop_exit
            _
        $region58: #{reverse.0} parent=42 // pred_fallthru
          _
        // Predicated region
        $region66: #{reverse.0} parent=42 // pred_check
          _
        $region67: #{reverse.0} parent=42 // pred_check_branch
          %115 = sbr.rel target = $region69
        $region68: #{reverse.0} parent=42 // pred_region
          _
        $region69: #{reverse.0} parent=42 // pred_fallthru
          _
      $region43: #{reverse.0} parent=38 // pred_fallthru
        _
      // Predicated region
      $region44: #{reverse.0} parent=38 // pred_check
        _
      $region45: #{reverse.0} parent=38 // pred_check_branch
        %77 = sbr.rel target = $region47
      $region46: #{reverse.0} parent=38 // pred_region
        %s79 = ssub.s32 256, 1
        loop: start=0, step=1, limit=1
        $region48: #{reverse.0} parent=46 // loop_pre_header
          _
        $region49: #{reverse.0} parent=46 // loop_header
          %s81 = sphi 0, %s85
          %p82 = scmp.ge.s32.totalorder %s81, 1
          %s86 = sphi [#allocation1], [#allocation1]
          %s87 = sphi %s1, %s1
        $region50: #{reverse.0} parent=46 // loop_header_branch
          %84 = sbr.rel (%p82) target = $region54
        $region51: #{reverse.0} parent=46 // loop_body
          %v88 = vld [vmem:[%s86] sm:%s79]
          %89 = vst [vmem:[%s87] sm:%s79] %v88
          %v90 = vld [vmem:[%s86 + $0x8] sm:%s79]
          %91 = vst [vmem:[%s87 + $0x8] sm:%s79] %v90
          %v92 = vld [vmem:[%s86 + $0x10] sm:%s79]
          %93 = vst [vmem:[%s87 + $0x10] sm:%s79] %v92
          %v94 = vld [vmem:[%s86 + $0x18] sm:%s79]
          %95 = vst [vmem:[%s87 + $0x18] sm:%s79] %v94
        $region52: #{reverse.0} parent=46 // loop_footer
          %s85 = sadd.s32 1, %s81
        $region53: #{reverse.0} parent=46 // loop_footer_branch
          %80 = sbr.rel target = $region49
        $region54: #{reverse.0} parent=46 // loop_exit
          _
      $region47: #{reverse.0} parent=38 // pred_fallthru
        _
    $region39: #{reverse.0} parent=1 // pred_fallthru
      _
    %116 = vnop

// kernel: _lambda_.1
$region0: #{_lambda_.1}
  #allocation0 [shape = 'u32[]', space=smem, size = 0x4, offset = 0x4, fixed_abs, tag = 'smem constant byte address 0x4 - core index']
  #allocation1 [shape = 'u32[72,128]{1,0:T(1,128)}', space=vmem, size = 0x9000, scoped, tag = 'internal scratch']
  %s0 = inlined_call_operand.vmem [shape: f32[2,16,2,128], index: 0, kind: input, shape index: {}]
  %s1 = inlined_call_operand.vmem [shape: bf16[2,16,16,128], index: 1, kind: input, shape index: {}]
  %s2 = inlined_call_operand.vmem [shape: f32[2,2,16,128], index: 2, kind: output, shape index: {}]
  %s3 = sld [smem:[#allocation0]]
  $region18: #{_lambda_.1} parent=0
    _
  %s5 = ssub.s32 1, %s3
  %s6 = scalar_select 0, %s5, %s3
  // Predicated region
  $region2: #{_lambda_.1} parent=0 // pred_check
    _
  $region3: #{_lambda_.1} parent=0 // pred_check_branch
    %8 = sbr.rel (0) target = $region5
  $region4: #{_lambda_.1} parent=0 // pred_region
    _
  $region5: #{_lambda_.1} parent=0 // pred_fallthru
    _
  // Predicated region
  $region6: #{_lambda_.1} parent=0 // pred_check
    _
  $region7: #{_lambda_.1} parent=0 // pred_check_branch
    %10 = sbr.rel (0) target = $region9
  $region8: #{_lambda_.1} parent=0 // pred_region
    _
  $region9: #{_lambda_.1} parent=0 // pred_fallthru
    _
  %v11 = vld [vmem:[%s1] sm:$0xf]
  %v12 = vld [vmem:[%s1 + $0x4] sm:$0xf]
  %v13 = vunpack.c.l.bf16 %v11
  %v14 = vunpack.c.l.bf16 %v12
  %s15 = scalar_lea.vmem %s1, 128
  %v16 = vld [vmem:[%s15] sm:$0xf]
  %v17 = vld [vmem:[%s15 + $0x4] sm:$0xf]
  %v18 = vunpack.c.l.bf16 %v16
  %v19 = vunpack.c.l.bf16 %v17
  %v20 = vld [vmem:[%s0] sm:$0x3]
  %v22 = vrot.slane %v20, 1
  %s23 = scalar_lea.vmem %s0, 32
  %v24 = vld [vmem:[%s23] sm:$0x3]
  %v26 = vrot.slane %v24, 1
  %v27 = vperm.slane %v20, 0
  %v28 = vperm.slane %v22, 0
  %v31 = vmul.f32 %v27, %v13
  %v32 = vmul.f32 %v27, %v14
  %v33 = vmul.f32 %v28, %v13
  %v34 = vmul.f32 %v28, %v14
  %v35 = vperm.slane %v24, 0
  %v36 = vperm.slane %v26, 0
  %v39 = vmul.f32 %v35, %v18
  %v40 = vmul.f32 %v35, %v19
  %v41 = vmul.f32 %v36, %v18
  %v42 = vmul.f32 %v36, %v19
  %v43 = vsub.f32 %v31, %v39
  %v44 = vsub.f32 %v32, %v40
  %v45 = vsub.f32 %v33, %v41
  %v46 = vsub.f32 %v34, %v42
  %v47 = vadd.f32 %v43, 0.0
  %v48 = vadd.f32 %v44, 0.0
  %v49 = vadd.f32 %v45, 0.0
  %v50 = vadd.f32 %v46, 0.0
  %v51 = vmul.f32 %v27, %v18
  %v52 = vmul.f32 %v27, %v19
  %v53 = vmul.f32 %v28, %v18
  %v54 = vmul.f32 %v28, %v19
  %v55 = vmul.f32 %v35, %v13
  %v56 = vmul.f32 %v35, %v14
  %v57 = vmul.f32 %v36, %v13
  %v58 = vmul.f32 %v36, %v14
  %v59 = vadd.f32 %v51, %v55
  %v60 = vadd.f32 %v52, %v56
  %v61 = vadd.f32 %v53, %v57
  %v62 = vadd.f32 %v54, %v58
  %v63 = vadd.f32 %v59, 0.0
  %v64 = vadd.f32 %v60, 0.0
  %v65 = vadd.f32 %v61, 0.0
  %v66 = vadd.f32 %v62, 0.0
  %s67 = scalar_lea.vmem %s1, 8
  %v68 = vld [vmem:[%s67] sm:$0xf]
  %v69 = vld [vmem:[%s67 + $0x4] sm:$0xf]
  %v70 = vunpack.c.l.bf16 %v68
  %v71 = vunpack.c.l.bf16 %v69
  %s72 = scalar_lea.vmem %s1, 136
  %v73 = vld [vmem:[%s72] sm:$0xf]
  %v74 = vld [vmem:[%s72 + $0x4] sm:$0xf]
  %v75 = vunpack.c.l.bf16 %v73
  %v76 = vunpack.c.l.bf16 %v74
  %s77 = scalar_lea.vmem %s0, 2
  %v78 = vld [vmem:[%s77] sm:$0x3]
  %v80 = vrot.slane %v78, 1
  %s81 = scalar_lea.vmem %s0, 34
  %v82 = vld [vmem:[%s81] sm:$0x3]
  %v84 = vrot.slane %v82, 1
  %v85 = vperm.slane %v78, 0
  %v86 = vperm.slane %v80, 0
  %v89 = vmul.f32 %v85, %v70
  %v90 = vmul.f32 %v85, %v71
  %v91 = vmul.f32 %v86, %v70
  %v92 = vmul.f32 %v86, %v71
  %v93 = vperm.slane %v82, 0
  %v94 = vperm.slane %v84, 0
  %v97 = vmul.f32 %v93, %v75
  %v98 = vmul.f32 %v93, %v76
  %v99 = vmul.f32 %v94, %v75
  %v100 = vmul.f32 %v94, %v76
  %v101 = vsub.f32 %v89, %v97
  %v102 = vsub.f32 %v90, %v98
  %v103 = vsub.f32 %v91, %v99
  %v104 = vsub.f32 %v92, %v100
  %v105 = vadd.f32 %v47, %v101
  %v106 = vadd.f32 %v48, %v102
  %v107 = vadd.f32 %v49, %v103
  %v108 = vadd.f32 %v50, %v104
  %v109 = vmul.f32 %v85, %v75
  %v110 = vmul.f32 %v85, %v76
  %v111 = vmul.f32 %v86, %v75
  %v112 = vmul.f32 %v86, %v76
  %v113 = vmul.f32 %v93, %v70
  %v114 = vmul.f32 %v93, %v71
  %v115 = vmul.f32 %v94, %v70
  %v116 = vmul.f32 %v94, %v71
  %v117 = vadd.f32 %v109, %v113
  %v118 = vadd.f32 %v110, %v114
  %v119 = vadd.f32 %v111, %v115
  %v120 = vadd.f32 %v112, %v116
  %v121 = vadd.f32 %v63, %v117
  %v122 = vadd.f32 %v64, %v118
  %v123 = vadd.f32 %v65, %v119
  %v124 = vadd.f32 %v66, %v120
  %s125 = scalar_lea.vmem %s1, 16
  %v126 = vld [vmem:[%s125] sm:$0xf]
  %v127 = vld [vmem:[%s125 + $0x4] sm:$0xf]
  %v128 = vunpack.c.l.bf16 %v126
  %v129 = vunpack.c.l.bf16 %v127
  %s130 = scalar_lea.vmem %s1, 144
  %v131 = vld [vmem:[%s130] sm:$0xf]
  %v132 = vld [vmem:[%s130 + $0x4] sm:$0xf]
  %v133 = vunpack.c.l.bf16 %v131
  %v134 = vunpack.c.l.bf16 %v132
  %s135 = scalar_lea.vmem %s0, 4
  %v136 = vld [vmem:[%s135] sm:$0x3]
  %v138 = vrot.slane %v136, 1
  %s139 = scalar_lea.vmem %s0, 36
  %v140 = vld [vmem:[%s139] sm:$0x3]
  %v142 = vrot.slane %v140, 1
  %v143 = vperm.slane %v136, 0
  %v144 = vperm.slane %v138, 0
  %v147 = vmul.f32 %v143, %v128
  %v148 = vmul.f32 %v143, %v129
  %v149 = vmul.f32 %v144, %v128
  %v150 = vmul.f32 %v144, %v129
  %v151 = vperm.slane %v140, 0
  %v152 = vperm.slane %v142, 0
  %v155 = vmul.f32 %v151, %v133
  %v156 = vmul.f32 %v151, %v134
  %v157 = vmul.f32 %v152, %v133
  %v158 = vmul.f32 %v152, %v134
  %v159 = vsub.f32 %v147, %v155
  %v160 = vsub.f32 %v148, %v156
  %v161 = vsub.f32 %v149, %v157
  %v162 = vsub.f32 %v150, %v158
  %v163 = vadd.f32 %v105, %v159
  %v164 = vadd.f32 %v106, %v160
  %v165 = vadd.f32 %v107, %v161
  %v166 = vadd.f32 %v108, %v162
  %v167 = vmul.f32 %v143, %v133
  %v168 = vmul.f32 %v143, %v134
  %v169 = vmul.f32 %v144, %v133
  %v170 = vmul.f32 %v144, %v134
  %v171 = vmul.f32 %v151, %v128
  %v172 = vmul.f32 %v151, %v129
  %v173 = vmul.f32 %v152, %v128
  %v174 = vmul.f32 %v152, %v129
  %v175 = vadd.f32 %v167, %v171
  %v176 = vadd.f32 %v168, %v172
  %v177 = vadd.f32 %v169, %v173
  %v178 = vadd.f32 %v170, %v174
  %v179 = vadd.f32 %v121, %v175
  %v180 = vadd.f32 %v122, %v176
  %v181 = vadd.f32 %v123, %v177
  %v182 = vadd.f32 %v124, %v178
  %s183 = scalar_lea.vmem %s1, 24
  %v184 = vld [vmem:[%s183] sm:$0xf]
  %v185 = vld [vmem:[%s183 + $0x4] sm:$0xf]
  %v186 = vunpack.c.l.bf16 %v184
  %v187 = vunpack.c.l.bf16 %v185
  %s188 = scalar_lea.vmem %s1, 152
  %v189 = vld [vmem:[%s188] sm:$0xf]
  %v190 = vld [vmem:[%s188 + $0x4] sm:$0xf]
  %v191 = vunpack.c.l.bf16 %v189
  %v192 = vunpack.c.l.bf16 %v190
  %s193 = scalar_lea.vmem %s0, 6
  %v194 = vld [vmem:[%s193] sm:$0x3]
  %v196 = vrot.slane %v194, 1
  %s197 = scalar_lea.vmem %s0, 38
  %v198 = vld [vmem:[%s197] sm:$0x3]
  %v200 = vrot.slane %v198, 1
  %v201 = vperm.slane %v194, 0
  %v202 = vperm.slane %v196, 0
  %v205 = vmul.f32 %v201, %v186
  %v206 = vmul.f32 %v201, %v187
  %v207 = vmul.f32 %v202, %v186
  %v208 = vmul.f32 %v202, %v187
  %v209 = vperm.slane %v198, 0
  %v210 = vperm.slane %v200, 0
  %v213 = vmul.f32 %v209, %v191
  %v214 = vmul.f32 %v209, %v192
  %v215 = vmul.f32 %v210, %v191
  %v216 = vmul.f32 %v210, %v192
  %v217 = vsub.f32 %v205, %v213
  %v218 = vsub.f32 %v206, %v214
  %v219 = vsub.f32 %v207, %v215
  %v220 = vsub.f32 %v208, %v216
  %v221 = vadd.f32 %v163, %v217
  %v222 = vadd.f32 %v164, %v218
  %v223 = vadd.f32 %v165, %v219
  %v224 = vadd.f32 %v166, %v220
  %v225 = vmul.f32 %v201, %v191
  %v226 = vmul.f32 %v201, %v192
  %v227 = vmul.f32 %v202, %v191
  %v228 = vmul.f32 %v202, %v192
  %v229 = vmul.f32 %v209, %v186
  %v230 = vmul.f32 %v209, %v187
  %v231 = vmul.f32 %v210, %v186
  %v232 = vmul.f32 %v210, %v187
  %v233 = vadd.f32 %v225, %v229
  %v234 = vadd.f32 %v226, %v230
  %v235 = vadd.f32 %v227, %v231
  %v236 = vadd.f32 %v228, %v232
  %v237 = vadd.f32 %v179, %v233
  %v238 = vadd.f32 %v180, %v234
  %v239 = vadd.f32 %v181, %v235
  %v240 = vadd.f32 %v182, %v236
  %s241 = scalar_lea.vmem %s1, 32
  %v242 = vld [vmem:[%s241] sm:$0xf]
  %v243 = vld [vmem:[%s241 + $0x4] sm:$0xf]
  %v244 = vunpack.c.l.bf16 %v242
  %v245 = vunpack.c.l.bf16 %v243
  %s246 = scalar_lea.vmem %s1, 160
  %v247 = vld [vmem:[%s246] sm:$0xf]
  %v248 = vld [vmem:[%s246 + $0x4] sm:$0xf]
  %v249 = vunpack.c.l.bf16 %v247
  %v250 = vunpack.c.l.bf16 %v248
  %s251 = scalar_lea.vmem %s0, 8
  %v252 = vld [vmem:[%s251] sm:$0x3]
  %v254 = vrot.slane %v252, 1
  %s255 = scalar_lea.vmem %s0, 40
  %v256 = vld [vmem:[%s255] sm:$0x3]
  %v258 = vrot.slane %v256, 1
  %v259 = vperm.slane %v252, 0
  %v260 = vperm.slane %v254, 0
  %v263 = vmul.f32 %v259, %v244
  %v264 = vmul.f32 %v259, %v245
  %v265 = vmul.f32 %v260, %v244
  %v266 = vmul.f32 %v260, %v245
  %v267 = vperm.slane %v256, 0
  %v268 = vperm.slane %v258, 0
  %v271 = vmul.f32 %v267, %v249
  %v272 = vmul.f32 %v267, %v250
  %v273 = vmul.f32 %v268, %v249
  %v274 = vmul.f32 %v268, %v250
  %v275 = vsub.f32 %v263, %v271
  %v276 = vsub.f32 %v264, %v272
  %v277 = vsub.f32 %v265, %v273
  %v278 = vsub.f32 %v266, %v274
  %v279 = vadd.f32 %v221, %v275
  %v280 = vadd.f32 %v222, %v276
  %v281 = vadd.f32 %v223, %v277
  %v282 = vadd.f32 %v224, %v278
  %v283 = vmul.f32 %v259, %v249
  %v284 = vmul.f32 %v259, %v250
  %v285 = vmul.f32 %v260, %v249
  %v286 = vmul.f32 %v260, %v250
  %v287 = vmul.f32 %v267, %v244
  %v288 = vmul.f32 %v267, %v245
  %v289 = vmul.f32 %v268, %v244
  %v290 = vmul.f32 %v268, %v245
  %v291 = vadd.f32 %v283, %v287
  %v292 = vadd.f32 %v284, %v288
  %v293 = vadd.f32 %v285, %v289
  %v294 = vadd.f32 %v286, %v290
  %v295 = vadd.f32 %v237, %v291
  %v296 = vadd.f32 %v238, %v292
  %v297 = vadd.f32 %v239, %v293
  %v298 = vadd.f32 %v240, %v294
  %s299 = scalar_lea.vmem %s1, 40
  %v300 = vld [vmem:[%s299] sm:$0xf]
  %v301 = vld [vmem:[%s299 + $0x4] sm:$0xf]
  %v302 = vunpack.c.l.bf16 %v300
  %v303 = vunpack.c.l.bf16 %v301
  %s304 = scalar_lea.vmem %s1, 168
  %v305 = vld [vmem:[%s304] sm:$0xf]
  %v306 = vld [vmem:[%s304 + $0x4] sm:$0xf]
  %v307 = vunpack.c.l.bf16 %v305
  %v308 = vunpack.c.l.bf16 %v306
  %s309 = scalar_lea.vmem %s0, 10
  %v310 = vld [vmem:[%s309] sm:$0x3]
  %v312 = vrot.slane %v310, 1
  %s313 = scalar_lea.vmem %s0, 42
  %v314 = vld [vmem:[%s313] sm:$0x3]
  %v316 = vrot.slane %v314, 1
  %v317 = vperm.slane %v310, 0
  %v318 = vperm.slane %v312, 0
  %v321 = vmul.f32 %v317, %v302
  %v322 = vmul.f32 %v317, %v303
  %v323 = vmul.f32 %v318, %v302
  %v324 = vmul.f32 %v318, %v303
  %v325 = vperm.slane %v314, 0
  %v326 = vperm.slane %v316, 0
  %v329 = vmul.f32 %v325, %v307
  %v330 = vmul.f32 %v325, %v308
  %v331 = vmul.f32 %v326, %v307
  %v332 = vmul.f32 %v326, %v308
  %v333 = vsub.f32 %v321, %v329
  %v334 = vsub.f32 %v322, %v330
  %v335 = vsub.f32 %v323, %v331
  %v336 = vsub.f32 %v324, %v332
  %v337 = vadd.f32 %v279, %v333
  %v338 = vadd.f32 %v280, %v334
  %v339 = vadd.f32 %v281, %v335
  %v340 = vadd.f32 %v282, %v336
  %v341 = vmul.f32 %v317, %v307
  %v342 = vmul.f32 %v317, %v308
  %v343 = vmul.f32 %v318, %v307
  %v344 = vmul.f32 %v318, %v308
  %v345 = vmul.f32 %v325, %v302
  %v346 = vmul.f32 %v325, %v303
  %v347 = vmul.f32 %v326, %v302
  %v348 = vmul.f32 %v326, %v303
  %v349 = vadd.f32 %v341, %v345
  %v350 = vadd.f32 %v342, %v346
  %v351 = vadd.f32 %v343, %v347
  %v352 = vadd.f32 %v344, %v348
  %v353 = vadd.f32 %v295, %v349
  %v354 = vadd.f32 %v296, %v350
  %v355 = vadd.f32 %v297, %v351
  %v356 = vadd.f32 %v298, %v352
  %s357 = scalar_lea.vmem %s1, 48
  %v358 = vld [vmem:[%s357] sm:$0xf]
  %v359 = vld [vmem:[%s357 + $0x4] sm:$0xf]
  %v360 = vunpack.c.l.bf16 %v358
  %v361 = vunpack.c.l.bf16 %v359
  %s362 = scalar_lea.vmem %s1, 176
  %v363 = vld [vmem:[%s362] sm:$0xf]
  %v364 = vld [vmem:[%s362 + $0x4] sm:$0xf]
  %v365 = vunpack.c.l.bf16 %v363
  %v366 = vunpack.c.l.bf16 %v364
  %s367 = scalar_lea.vmem %s0, 12
  %v368 = vld [vmem:[%s367] sm:$0x3]
  %v370 = vrot.slane %v368, 1
  %s371 = scalar_lea.vmem %s0, 44
  %v372 = vld [vmem:[%s371] sm:$0x3]
  %v374 = vrot.slane %v372, 1
  %v375 = vperm.slane %v368, 0
  %v376 = vperm.slane %v370, 0
  %v379 = vmul.f32 %v375, %v360
  %v380 = vmul.f32 %v375, %v361
  %v381 = vmul.f32 %v376, %v360
  %v382 = vmul.f32 %v376, %v361
  %v383 = vperm.slane %v372, 0
  %v384 = vperm.slane %v374, 0
  %v387 = vmul.f32 %v383, %v365
  %v388 = vmul.f32 %v383, %v366
  %v389 = vmul.f32 %v384, %v365
  %v390 = vmul.f32 %v384, %v366
  %v391 = vsub.f32 %v379, %v387
  %v392 = vsub.f32 %v380, %v388
  %v393 = vsub.f32 %v381, %v389
  %v394 = vsub.f32 %v382, %v390
  %v395 = vadd.f32 %v337, %v391
  %v396 = vadd.f32 %v338, %v392
  %v397 = vadd.f32 %v339, %v393
  %v398 = vadd.f32 %v340, %v394
  %v399 = vmul.f32 %v375, %v365
  %v400 = vmul.f32 %v375, %v366
  %v401 = vmul.f32 %v376, %v365
  %v402 = vmul.f32 %v376, %v366
  %v403 = vmul.f32 %v383, %v360
  %v404 = vmul.f32 %v383, %v361
  %v405 = vmul.f32 %v384, %v360
  %v406 = vmul.f32 %v384, %v361
  %v407 = vadd.f32 %v399, %v403
  %v408 = vadd.f32 %v400, %v404
  %v409 = vadd.f32 %v401, %v405
  %v410 = vadd.f32 %v402, %v406
  %v411 = vadd.f32 %v353, %v407
  %v412 = vadd.f32 %v354, %v408
  %v413 = vadd.f32 %v355, %v409
  %v414 = vadd.f32 %v356, %v410
  %s415 = scalar_lea.vmem %s1, 56
  %v416 = vld [vmem:[%s415] sm:$0xf]
  %v417 = vld [vmem:[%s415 + $0x4] sm:$0xf]
  %v418 = vunpack.c.l.bf16 %v416
  %v419 = vunpack.c.l.bf16 %v417
  %s420 = scalar_lea.vmem %s1, 184
  %v421 = vld [vmem:[%s420] sm:$0xf]
  %v422 = vld [vmem:[%s420 + $0x4] sm:$0xf]
  %v423 = vunpack.c.l.bf16 %v421
  %v424 = vunpack.c.l.bf16 %v422
  %s425 = scalar_lea.vmem %s0, 14
  %v426 = vld [vmem:[%s425] sm:$0x3]
  %v428 = vrot.slane %v426, 1
  %s429 = scalar_lea.vmem %s0, 46
  %v430 = vld [vmem:[%s429] sm:$0x3]
  %v432 = vrot.slane %v430, 1
  %v433 = vperm.slane %v426, 0
  %v434 = vperm.slane %v428, 0
  %v437 = vmul.f32 %v433, %v418
  %v438 = vmul.f32 %v433, %v419
  %v439 = vmul.f32 %v434, %v418
  %v440 = vmul.f32 %v434, %v419
  %v441 = vperm.slane %v430, 0
  %v442 = vperm.slane %v432, 0
  %v445 = vmul.f32 %v441, %v423
  %v446 = vmul.f32 %v441, %v424
  %v447 = vmul.f32 %v442, %v423
  %v448 = vmul.f32 %v442, %v424
  %v449 = vsub.f32 %v437, %v445
  %v450 = vsub.f32 %v438, %v446
  %v451 = vsub.f32 %v439, %v447
  %v452 = vsub.f32 %v440, %v448
  %v453 = vadd.f32 %v395, %v449
  %v454 = vadd.f32 %v396, %v450
  %v455 = vadd.f32 %v397, %v451
  %v456 = vadd.f32 %v398, %v452
  %v457 = vmul.f32 %v433, %v423
  %v458 = vmul.f32 %v433, %v424
  %v459 = vmul.f32 %v434, %v423
  %v460 = vmul.f32 %v434, %v424
  %v461 = vmul.f32 %v441, %v418
  %v462 = vmul.f32 %v441, %v419
  %v463 = vmul.f32 %v442, %v418
  %v464 = vmul.f32 %v442, %v419
  %v465 = vadd.f32 %v457, %v461
  %v466 = vadd.f32 %v458, %v462
  %v467 = vadd.f32 %v459, %v463
  %v468 = vadd.f32 %v460, %v464
  %v469 = vadd.f32 %v411, %v465
  %v470 = vadd.f32 %v412, %v466
  %v471 = vadd.f32 %v413, %v467
  %v472 = vadd.f32 %v414, %v468
  %s473 = scalar_lea.vmem %s1, 64
  %v474 = vld [vmem:[%s473] sm:$0xf]
  %v475 = vld [vmem:[%s473 + $0x4] sm:$0xf]
  %v476 = vunpack.c.l.bf16 %v474
  %v477 = vunpack.c.l.bf16 %v475
  %s478 = scalar_lea.vmem %s1, 192
  %v479 = vld [vmem:[%s478] sm:$0xf]
  %v480 = vld [vmem:[%s478 + $0x4] sm:$0xf]
  %v481 = vunpack.c.l.bf16 %v479
  %v482 = vunpack.c.l.bf16 %v480
  %s483 = scalar_lea.vmem %s0, 16
  %v484 = vld [vmem:[%s483] sm:$0x3]
  %v486 = vrot.slane %v484, 1
  %s487 = scalar_lea.vmem %s0, 48
  %v488 = vld [vmem:[%s487] sm:$0x3]
  %v490 = vrot.slane %v488, 1
  %v491 = vperm.slane %v484, 0
  %v492 = vperm.slane %v486, 0
  %v495 = vmul.f32 %v491, %v476
  %v496 = vmul.f32 %v491, %v477
  %v497 = vmul.f32 %v492, %v476
  %v498 = vmul.f32 %v492, %v477
  %v499 = vperm.slane %v488, 0
  %v500 = vperm.slane %v490, 0
  %v503 = vmul.f32 %v499, %v481
  %v504 = vmul.f32 %v499, %v482
  %v505 = vmul.f32 %v500, %v481
  %v506 = vmul.f32 %v500, %v482
  %v507 = vsub.f32 %v495, %v503
  %v508 = vsub.f32 %v496, %v504
  %v509 = vsub.f32 %v497, %v505
  %v510 = vsub.f32 %v498, %v506
  %v511 = vadd.f32 %v453, %v507
  %v512 = vadd.f32 %v454, %v508
  %v513 = vadd.f32 %v455, %v509
  %v514 = vadd.f32 %v456, %v510
  %v515 = vmul.f32 %v491, %v481
  %v516 = vmul.f32 %v491, %v482
  %v517 = vmul.f32 %v492, %v481
  %v518 = vmul.f32 %v492, %v482
  %v519 = vmul.f32 %v499, %v476
  %v520 = vmul.f32 %v499, %v477
  %v521 = vmul.f32 %v500, %v476
  %v522 = vmul.f32 %v500, %v477
  %v523 = vadd.f32 %v515, %v519
  %v524 = vadd.f32 %v516, %v520
  %v525 = vadd.f32 %v517, %v521
  %v526 = vadd.f32 %v518, %v522
  %v527 = vadd.f32 %v469, %v523
  %v528 = vadd.f32 %v470, %v524
  %v529 = vadd.f32 %v471, %v525
  %v530 = vadd.f32 %v472, %v526
  %s531 = scalar_lea.vmem %s1, 72
  %v532 = vld [vmem:[%s531] sm:$0xf]
  %v533 = vld [vmem:[%s531 + $0x4] sm:$0xf]
  %v534 = vunpack.c.l.bf16 %v532
  %v535 = vunpack.c.l.bf16 %v533
  %s536 = scalar_lea.vmem %s1, 200
  %v537 = vld [vmem:[%s536] sm:$0xf]
  %v538 = vld [vmem:[%s536 + $0x4] sm:$0xf]
  %v539 = vunpack.c.l.bf16 %v537
  %v540 = vunpack.c.l.bf16 %v538
  %s541 = scalar_lea.vmem %s0, 18
  %v542 = vld [vmem:[%s541] sm:$0x3]
  %v544 = vrot.slane %v542, 1
  %s545 = scalar_lea.vmem %s0, 50
  %v546 = vld [vmem:[%s545] sm:$0x3]
  %v548 = vrot.slane %v546, 1
  %v549 = vperm.slane %v542, 0
  %v550 = vperm.slane %v544, 0
  %v553 = vmul.f32 %v549, %v534
  %v554 = vmul.f32 %v549, %v535
  %v555 = vmul.f32 %v550, %v534
  %v556 = vmul.f32 %v550, %v535
  %v557 = vperm.slane %v546, 0
  %v558 = vperm.slane %v548, 0
  %v561 = vmul.f32 %v557, %v539
  %v562 = vmul.f32 %v557, %v540
  %v563 = vmul.f32 %v558, %v539
  %v564 = vmul.f32 %v558, %v540
  %v565 = vsub.f32 %v553, %v561
  %v566 = vsub.f32 %v554, %v562
  %v567 = vsub.f32 %v555, %v563
  %v568 = vsub.f32 %v556, %v564
  %v569 = vadd.f32 %v511, %v565
  %v570 = vadd.f32 %v512, %v566
  %v571 = vadd.f32 %v513, %v567
  %v572 = vadd.f32 %v514, %v568
  %v573 = vmul.f32 %v549, %v539
  %v574 = vmul.f32 %v549, %v540
  %v575 = vmul.f32 %v550, %v539
  %v576 = vmul.f32 %v550, %v540
  %v577 = vmul.f32 %v557, %v534
  %v578 = vmul.f32 %v557, %v535
  %v579 = vmul.f32 %v558, %v534
  %v580 = vmul.f32 %v558, %v535
  %v581 = vadd.f32 %v573, %v577
  %v582 = vadd.f32 %v574, %v578
  %v583 = vadd.f32 %v575, %v579
  %v584 = vadd.f32 %v576, %v580
  %v585 = vadd.f32 %v527, %v581
  %v586 = vadd.f32 %v528, %v582
  %v587 = vadd.f32 %v529, %v583
  %v588 = vadd.f32 %v530, %v584
  %s589 = scalar_lea.vmem %s1, 80
  %v590 = vld [vmem:[%s589] sm:$0xf]
  %v591 = vld [vmem:[%s589 + $0x4] sm:$0xf]
  %v592 = vunpack.c.l.bf16 %v590
  %v593 = vunpack.c.l.bf16 %v591
  %s594 = scalar_lea.vmem %s1, 208
  %v595 = vld [vmem:[%s594] sm:$0xf]
  %v596 = vld [vmem:[%s594 + $0x4] sm:$0xf]
  %v597 = vunpack.c.l.bf16 %v595
  %v598 = vunpack.c.l.bf16 %v596
  %s599 = scalar_lea.vmem %s0, 20
  %v600 = vld [vmem:[%s599] sm:$0x3]
  %v602 = vrot.slane %v600, 1
  %s603 = scalar_lea.vmem %s0, 52
  %v604 = vld [vmem:[%s603] sm:$0x3]
  %v606 = vrot.slane %v604, 1
  %v607 = vperm.slane %v600, 0
  %v608 = vperm.slane %v602, 0
  %v611 = vmul.f32 %v607, %v592
  %v612 = vmul.f32 %v607, %v593
  %v613 = vmul.f32 %v608, %v592
  %v614 = vmul.f32 %v608, %v593
  %v615 = vperm.slane %v604, 0
  %v616 = vperm.slane %v606, 0
  %v619 = vmul.f32 %v615, %v597
  %v620 = vmul.f32 %v615, %v598
  %v621 = vmul.f32 %v616, %v597
  %v622 = vmul.f32 %v616, %v598
  %v623 = vsub.f32 %v611, %v619
  %v624 = vsub.f32 %v612, %v620
  %v625 = vsub.f32 %v613, %v621
  %v626 = vsub.f32 %v614, %v622
  %v627 = vadd.f32 %v569, %v623
  %v628 = vadd.f32 %v570, %v624
  %v629 = vadd.f32 %v571, %v625
  %v630 = vadd.f32 %v572, %v626
  %v631 = vmul.f32 %v607, %v597
  %v632 = vmul.f32 %v607, %v598
  %v633 = vmul.f32 %v608, %v597
  %v634 = vmul.f32 %v608, %v598
  %v635 = vmul.f32 %v615, %v592
  %v636 = vmul.f32 %v615, %v593
  %v637 = vmul.f32 %v616, %v592
  %v638 = vmul.f32 %v616, %v593
  %v639 = vadd.f32 %v631, %v635
  %v640 = vadd.f32 %v632, %v636
  %v641 = vadd.f32 %v633, %v637
  %v642 = vadd.f32 %v634, %v638
  %v643 = vadd.f32 %v585, %v639
  %v644 = vadd.f32 %v586, %v640
  %v645 = vadd.f32 %v587, %v641
  %v646 = vadd.f32 %v588, %v642
  %s647 = scalar_lea.vmem %s1, 88
  %v648 = vld [vmem:[%s647] sm:$0xf]
  %v649 = vld [vmem:[%s647 + $0x4] sm:$0xf]
  %v650 = vunpack.c.l.bf16 %v648
  %v651 = vunpack.c.l.bf16 %v649
  %s652 = scalar_lea.vmem %s1, 216
  %v653 = vld [vmem:[%s652] sm:$0xf]
  %v654 = vld [vmem:[%s652 + $0x4] sm:$0xf]
  %v655 = vunpack.c.l.bf16 %v653
  %v656 = vunpack.c.l.bf16 %v654
  %s657 = scalar_lea.vmem %s0, 22
  %v658 = vld [vmem:[%s657] sm:$0x3]
  %v660 = vrot.slane %v658, 1
  %s661 = scalar_lea.vmem %s0, 54
  %v662 = vld [vmem:[%s661] sm:$0x3]
  %v664 = vrot.slane %v662, 1
  %v665 = vperm.slane %v658, 0
  %v666 = vperm.slane %v660, 0
  %v669 = vmul.f32 %v665, %v650
  %v670 = vmul.f32 %v665, %v651
  %v671 = vmul.f32 %v666, %v650
  %v672 = vmul.f32 %v666, %v651
  %v673 = vperm.slane %v662, 0
  %v674 = vperm.slane %v664, 0
  %v677 = vmul.f32 %v673, %v655
  %v678 = vmul.f32 %v673, %v656
  %v679 = vmul.f32 %v674, %v655
  %v680 = vmul.f32 %v674, %v656
  %v681 = vsub.f32 %v669, %v677
  %v682 = vsub.f32 %v670, %v678
  %v683 = vsub.f32 %v671, %v679
  %v684 = vsub.f32 %v672, %v680
  %v685 = vadd.f32 %v627, %v681
  %v686 = vadd.f32 %v628, %v682
  %v687 = vadd.f32 %v629, %v683
  %v688 = vadd.f32 %v630, %v684
  %v689 = vmul.f32 %v665, %v655
  %v690 = vmul.f32 %v665, %v656
  %v691 = vmul.f32 %v666, %v655
  %v692 = vmul.f32 %v666, %v656
  %v693 = vmul.f32 %v673, %v650
  %v694 = vmul.f32 %v673, %v651
  %v695 = vmul.f32 %v674, %v650
  %v696 = vmul.f32 %v674, %v651
  %v697 = vadd.f32 %v689, %v693
  %v698 = vadd.f32 %v690, %v694
  %v699 = vadd.f32 %v691, %v695
  %v700 = vadd.f32 %v692, %v696
  %v701 = vadd.f32 %v643, %v697
  %v702 = vadd.f32 %v644, %v698
  %v703 = vadd.f32 %v645, %v699
  %v704 = vadd.f32 %v646, %v700
  %s705 = scalar_lea.vmem %s1, 96
  %v706 = vld [vmem:[%s705] sm:$0xf]
  %v707 = vld [vmem:[%s705 + $0x4] sm:$0xf]
  %v708 = vunpack.c.l.bf16 %v706
  %v709 = vunpack.c.l.bf16 %v707
  %s710 = scalar_lea.vmem %s1, 224
  %v711 = vld [vmem:[%s710] sm:$0xf]
  %v712 = vld [vmem:[%s710 + $0x4] sm:$0xf]
  %v713 = vunpack.c.l.bf16 %v711
  %v714 = vunpack.c.l.bf16 %v712
  %s715 = scalar_lea.vmem %s0, 24
  %v716 = vld [vmem:[%s715] sm:$0x3]
  %v718 = vrot.slane %v716, 1
  %s719 = scalar_lea.vmem %s0, 56
  %v720 = vld [vmem:[%s719] sm:$0x3]
  %v722 = vrot.slane %v720, 1
  %v723 = vperm.slane %v716, 0
  %v724 = vperm.slane %v718, 0
  %v727 = vmul.f32 %v723, %v708
  %v728 = vmul.f32 %v723, %v709
  %v729 = vmul.f32 %v724, %v708
  %v730 = vmul.f32 %v724, %v709
  %v731 = vperm.slane %v720, 0
  %v732 = vperm.slane %v722, 0
  %v735 = vmul.f32 %v731, %v713
  %v736 = vmul.f32 %v731, %v714
  %v737 = vmul.f32 %v732, %v713
  %v738 = vmul.f32 %v732, %v714
  %v739 = vsub.f32 %v727, %v735
  %v740 = vsub.f32 %v728, %v736
  %v741 = vsub.f32 %v729, %v737
  %v742 = vsub.f32 %v730, %v738
  %v743 = vadd.f32 %v685, %v739
  %v744 = vadd.f32 %v686, %v740
  %v745 = vadd.f32 %v687, %v741
  %v746 = vadd.f32 %v688, %v742
  %v747 = vmul.f32 %v723, %v713
  %v748 = vmul.f32 %v723, %v714
  %v749 = vmul.f32 %v724, %v713
  %v750 = vmul.f32 %v724, %v714
  %v751 = vmul.f32 %v731, %v708
  %v752 = vmul.f32 %v731, %v709
  %v753 = vmul.f32 %v732, %v708
  %v754 = vmul.f32 %v732, %v709
  %v755 = vadd.f32 %v747, %v751
  %v756 = vadd.f32 %v748, %v752
  %v757 = vadd.f32 %v749, %v753
  %v758 = vadd.f32 %v750, %v754
  %v759 = vadd.f32 %v701, %v755
  %v760 = vadd.f32 %v702, %v756
  %v761 = vadd.f32 %v703, %v757
  %v762 = vadd.f32 %v704, %v758
  %s763 = scalar_lea.vmem %s1, 104
  %v764 = vld [vmem:[%s763] sm:$0xf]
  %v765 = vld [vmem:[%s763 + $0x4] sm:$0xf]
  %v766 = vunpack.c.l.bf16 %v764
  %v767 = vunpack.c.l.bf16 %v765
  %s768 = scalar_lea.vmem %s1, 232
  %v769 = vld [vmem:[%s768] sm:$0xf]
  %v770 = vld [vmem:[%s768 + $0x4] sm:$0xf]
  %v771 = vunpack.c.l.bf16 %v769
  %v772 = vunpack.c.l.bf16 %v770
  %s773 = scalar_lea.vmem %s0, 26
  %v774 = vld [vmem:[%s773] sm:$0x3]
  %v776 = vrot.slane %v774, 1
  %s777 = scalar_lea.vmem %s0, 58
  %v778 = vld [vmem:[%s777] sm:$0x3]
  %v780 = vrot.slane %v778, 1
  %v781 = vperm.slane %v774, 0
  %v782 = vperm.slane %v776, 0
  %v785 = vmul.f32 %v781, %v766
  %v786 = vmul.f32 %v781, %v767
  %v787 = vmul.f32 %v782, %v766
  %v788 = vmul.f32 %v782, %v767
  %v789 = vperm.slane %v778, 0
  %v790 = vperm.slane %v780, 0
  %v793 = vmul.f32 %v789, %v771
  %v794 = vmul.f32 %v789, %v772
  %v795 = vmul.f32 %v790, %v771
  %v796 = vmul.f32 %v790, %v772
  %v797 = vsub.f32 %v785, %v793
  %v798 = vsub.f32 %v786, %v794
  %v799 = vsub.f32 %v787, %v795
  %v800 = vsub.f32 %v788, %v796
  %v801 = vadd.f32 %v743, %v797
  %v802 = vadd.f32 %v744, %v798
  %v803 = vadd.f32 %v745, %v799
  %v804 = vadd.f32 %v746, %v800
  %v805 = vmul.f32 %v781, %v771
  %v806 = vmul.f32 %v781, %v772
  %v807 = vmul.f32 %v782, %v771
  %v808 = vmul.f32 %v782, %v772
  %v809 = vmul.f32 %v789, %v766
  %v810 = vmul.f32 %v789, %v767
  %v811 = vmul.f32 %v790, %v766
  %v812 = vmul.f32 %v790, %v767
  %v813 = vadd.f32 %v805, %v809
  %v814 = vadd.f32 %v806, %v810
  %v815 = vadd.f32 %v807, %v811
  %v816 = vadd.f32 %v808, %v812
  %v817 = vadd.f32 %v759, %v813
  %v818 = vadd.f32 %v760, %v814
  %v819 = vadd.f32 %v761, %v815
  %v820 = vadd.f32 %v762, %v816
  %s821 = scalar_lea.vmem %s1, 112
  %v822 = vld [vmem:[%s821] sm:$0xf]
  %v823 = vld [vmem:[%s821 + $0x4] sm:$0xf]
  %v824 = vunpack.c.l.bf16 %v822
  %v825 = vunpack.c.l.bf16 %v823
  %s826 = scalar_lea.vmem %s1, 240
  %v827 = vld [vmem:[%s826] sm:$0xf]
  %v828 = vld [vmem:[%s826 + $0x4] sm:$0xf]
  %v829 = vunpack.c.l.bf16 %v827
  %v830 = vunpack.c.l.bf16 %v828
  %s831 = scalar_lea.vmem %s0, 28
  %v832 = vld [vmem:[%s831] sm:$0x3]
  %v834 = vrot.slane %v832, 1
  %s835 = scalar_lea.vmem %s0, 60
  %v836 = vld [vmem:[%s835] sm:$0x3]
  %v838 = vrot.slane %v836, 1
  %v839 = vperm.slane %v832, 0
  %v840 = vperm.slane %v834, 0
  %v843 = vmul.f32 %v839, %v824
  %v844 = vmul.f32 %v839, %v825
  %v845 = vmul.f32 %v840, %v824
  %v846 = vmul.f32 %v840, %v825
  %v847 = vperm.slane %v836, 0
  %v848 = vperm.slane %v838, 0
  %v851 = vmul.f32 %v847, %v829
  %v852 = vmul.f32 %v847, %v830
  %v853 = vmul.f32 %v848, %v829
  %v854 = vmul.f32 %v848, %v830
  %v855 = vsub.f32 %v843, %v851
  %v856 = vsub.f32 %v844, %v852
  %v857 = vsub.f32 %v845, %v853
  %v858 = vsub.f32 %v846, %v854
  %v859 = vadd.f32 %v801, %v855
  %v860 = vadd.f32 %v802, %v856
  %v861 = vadd.f32 %v803, %v857
  %v862 = vadd.f32 %v804, %v858
  %v863 = vmul.f32 %v839, %v829
  %v864 = vmul.f32 %v839, %v830
  %v865 = vmul.f32 %v840, %v829
  %v866 = vmul.f32 %v840, %v830
  %v867 = vmul.f32 %v847, %v824
  %v868 = vmul.f32 %v847, %v825
  %v869 = vmul.f32 %v848, %v824
  %v870 = vmul.f32 %v848, %v825
  %v871 = vadd.f32 %v863, %v867
  %v872 = vadd.f32 %v864, %v868
  %v873 = vadd.f32 %v865, %v869
  %v874 = vadd.f32 %v866, %v870
  %v875 = vadd.f32 %v817, %v871
  %v876 = vadd.f32 %v818, %v872
  %v877 = vadd.f32 %v819, %v873
  %v878 = vadd.f32 %v820, %v874
  %s879 = scalar_lea.vmem %s1, 120
  %v880 = vld [vmem:[%s879] sm:$0xf]
  %v881 = vld [vmem:[%s879 + $0x4] sm:$0xf]
  %v882 = vunpack.c.l.bf16 %v880
  %v883 = vunpack.c.l.bf16 %v881
  %s884 = scalar_lea.vmem %s1, 248
  %v885 = vld [vmem:[%s884] sm:$0xf]
  %v886 = vld [vmem:[%s884 + $0x4] sm:$0xf]
  %v887 = vunpack.c.l.bf16 %v885
  %v888 = vunpack.c.l.bf16 %v886
  %s889 = scalar_lea.vmem %s0, 30
  %v890 = vld [vmem:[%s889] sm:$0x3]
  %v892 = vrot.slane %v890, 1
  %s893 = scalar_lea.vmem %s0, 62
  %v894 = vld [vmem:[%s893] sm:$0x3]
  %v896 = vrot.slane %v894, 1
  %v897 = vperm.slane %v890, 0
  %v898 = vperm.slane %v892, 0
  %v901 = vmul.f32 %v897, %v882
  %v902 = vmul.f32 %v897, %v883
  %v903 = vmul.f32 %v898, %v882
  %v904 = vmul.f32 %v898, %v883
  %v905 = vperm.slane %v894, 0
  %v906 = vperm.slane %v896, 0
  %v909 = vmul.f32 %v905, %v887
  %v910 = vmul.f32 %v905, %v888
  %v911 = vmul.f32 %v906, %v887
  %v912 = vmul.f32 %v906, %v888
  %v913 = vsub.f32 %v901, %v909
  %v914 = vsub.f32 %v902, %v910
  %v915 = vsub.f32 %v903, %v911
  %v916 = vsub.f32 %v904, %v912
  %v917 = vadd.f32 %v859, %v913
  %v918 = vadd.f32 %v860, %v914
  %v919 = vadd.f32 %v861, %v915
  %v920 = vadd.f32 %v862, %v916
  %v921 = vmul.f32 %v897, %v887
  %v922 = vmul.f32 %v897, %v888
  %v923 = vmul.f32 %v898, %v887
  %v924 = vmul.f32 %v898, %v888
  %v925 = vmul.f32 %v905, %v882
  %v926 = vmul.f32 %v905, %v883
  %v927 = vmul.f32 %v906, %v882
  %v928 = vmul.f32 %v906, %v883
  %v929 = vadd.f32 %v921, %v925
  %v930 = vadd.f32 %v922, %v926
  %v931 = vadd.f32 %v923, %v927
  %v932 = vadd.f32 %v924, %v928
  %v933 = vadd.f32 %v875, %v929
  %v934 = vadd.f32 %v876, %v930
  %v935 = vadd.f32 %v877, %v931
  %v936 = vadd.f32 %v878, %v932
  %937 = vst [vmem:[%s2] sm:$0xff] %v917
  %938 = vst [vmem:[%s2 + $0x8] sm:$0xff] %v918
  %939 = vst [vmem:[%s2 + $0x10] sm:$0xff] %v919
  %940 = vst [vmem:[%s2 + $0x18] sm:$0xff] %v920
  %s941 = scalar_lea.vmem %s2, 32
  %942 = vst [vmem:[%s941] sm:$0xff] %v933
  %943 = vst [vmem:[%s941 + $0x8] sm:$0xff] %v934
  %944 = vst [vmem:[%s941 + $0x10] sm:$0xff] %v935
  %945 = vst [vmem:[%s941 + $0x18] sm:$0xff] %v936
  // Predicated region
  $region10: #{_lambda_.1} parent=0 // pred_check
    _
  $region11: #{_lambda_.1} parent=0 // pred_check_branch
    %947 = sbr.rel (0) target = $region13
  $region12: #{_lambda_.1} parent=0 // pred_region
    _
  $region13: #{_lambda_.1} parent=0 // pred_fallthru
    _
  // Predicated region
  $region14: #{_lambda_.1} parent=0 // pred_check
    _
  $region15: #{_lambda_.1} parent=0 // pred_check_branch
    %949 = sbr.rel (0) target = $region17
  $region16: #{_lambda_.1} parent=0 // pred_region
    _
  $region17: #{_lambda_.1} parent=0 // pred_fallthru
    _

</llo_original>
